<compile_context>
chip_gen: v6e
topology: v6e:2x2x1
jax: 0.10.0
libtpu: 0.0.40
codegen_flags: <defaults>
</compile_context>

<pallas_src>
import functools

import jax
import jax.numpy as jnp
from jax.experimental import pallas as pl
from jax.experimental.pallas import tpu as pltpu


def _causal_attn_kernel(xq_ref, xkv_ref, wq_ref, wkv_ref, wp_ref, wc_ref,
                        bp_ref, bc_ref, out_ref, cf_ref, k_sc, v_sc, o_sc,
                        *, num_heads):
    f32, bf16 = jnp.float32, jnp.bfloat16
    C = wq_ref.shape[1]
    hd = C // num_heads

    # --- K/V for the whole sequence: once per batch element ----------------
    @pl.when(pl.program_id(1) == 0)
    def _():
        xkv = xkv_ref[0].astype(bf16)                                  # (N, C)
        kv = jnp.dot(xkv, wkv_ref[...], preferred_element_type=f32)    # (N, 2C)
        k_sc[...] = kv[:, :C].astype(bf16)
        v_sc[...] = kv[:, C:].astype(bf16)

    # --- fused, full-width query projection (scale folded into wq) ---------
    xq = xq_ref[0].astype(bf16)                                        # (TQ, C)
    q = jnp.dot(xq, wq_ref[...], preferred_element_type=f32).astype(bf16)
    k = k_sc[...]                                                      # (N, C)
    v = v_sc[...]                                                      # (N, C)

    # --- per-head attention on lane-packed activations ---------------------
    # hd = C/H is small, so the score/PV matmuls are MXU-depth-starved in any
    # formulation; keeping q/k/v packed as (rows, C) avoids the ~8x lane
    # padding of an (H, rows, hd) layout.  Softmax math stays in f32.
    for h in range(num_heads):
        lo, hi = h * hd, (h + 1) * hd
        q_h = q[:, lo:hi]                                              # (TQ, hd)
        k_h = k[:, lo:hi]                                              # (N, hd)
        v_h = v[:, lo:hi]                                              # (N, hd)
        s = jnp.einsum('qd,kd->qk', q_h, k_h,
                       preferred_element_type=f32)                     # (TQ, N)
        s = s - jnp.max(s, axis=-1, keepdims=True)
        e = jnp.exp(s)
        p = e * pl.reciprocal(jnp.sum(e, axis=-1, keepdims=True), approx=True)
        o_sc[:, lo:hi] = jnp.dot(p.astype(bf16), v_h,
                                 preferred_element_type=f32)           # (TQ, hd)

    # Heads are already concatenated lane-dense in o_sc, so the output
    # projection is a single full-depth (C,C) matmul (no head-sum chain).
    o = o_sc[...].astype(bf16)                                         # (TQ, C)
    xp = jnp.dot(o, wp_ref[...], preferred_element_type=f32) + bp_ref[...]
    cf = jnp.dot(xp.astype(bf16), wc_ref[...],
                 preferred_element_type=f32) + bc_ref[...]

    out_ref[0] = xp.astype(out_ref.dtype)
    cf_ref[0] = cf.astype(cf_ref.dtype)


def _pick_q_tile(n, target=256):
    """Largest multiple-of-8 divisor of n that is <= target (or n itself)."""
    if n <= target:
        return n
    best = 0
    for t in range(8, target + 1, 8):
        if n % t == 0:
            best = t
    return best if best else n


def _vmem_limit_bytes(frac=0.8, fallback=48 * 1024 * 1024):
    """Per-generation VMEM limit (~80% of physical), with a safe fallback."""
    try:
        cap = getattr(pltpu.get_tpu_info(), "vmem_capacity_bytes", None)
        if cap:
            return int(cap * frac)
    except Exception:
        pass
    return fallback


def causal_attention(x, wqkv, wp, bp, wc, bc, *, num_heads, q_tile=256):
    """Pallas implementation of CausalAttention.forward (mask=None path)."""
    B, N, C = x.shape
    assert C % num_heads == 0
    hd = C // num_heads
    scale = hd ** -0.5
    wdt = jnp.bfloat16

    TQ = _pick_q_tile(N, q_tile)
    NQ = N // TQ

    # --- host-side (free) weight re-layout; no in-kernel transposes --------
    wq_t = (wqkv[0:C].T * scale).astype(wdt)       # (C, C)   scale folded in
    wkv_t = wqkv[C:3 * C].T.astype(wdt)            # (C, 2C)  fused K|V
    wp_t = wp.T.astype(wdt)                        # (C, C)
    wc_t = wc.T.astype(wdt)                        # (C, C)
    bp2 = bp.reshape(1, C).astype(jnp.float32)
    bc2 = bc.reshape(1, C).astype(jnp.float32)

    vmem = pltpu.MemorySpace.VMEM
    in_specs = [
        pl.BlockSpec((1, TQ, C), lambda b, qi: (b, qi, 0)),  # x: query tile
        pl.BlockSpec((1, N, C), lambda b, qi: (b, 0, 0)),    # x: full seq (K/V)
        pl.BlockSpec(memory_space=vmem),                     # wq  (C, C)
        pl.BlockSpec(memory_space=vmem),                     # wkv (C, 2C)
        pl.BlockSpec(memory_space=vmem),                     # wp  (C, C)
        pl.BlockSpec(memory_space=vmem),                     # wc  (C, C)
        pl.BlockSpec(memory_space=vmem),                     # bp  (1, C)
        pl.BlockSpec(memory_space=vmem),                     # bc  (1, C)
    ]
    out_specs = [
        pl.BlockSpec((1, TQ, C), lambda b, qi: (b, qi, 0)),  # x (projected)
        pl.BlockSpec((1, TQ, C), lambda b, qi: (b, qi, 0)),  # causal_features
    ]
    out_shape = (jax.ShapeDtypeStruct((B, N, C), x.dtype),
                 jax.ShapeDtypeStruct((B, N, C), x.dtype))
    scratch_shapes = [
        pltpu.VMEM((N, C), jnp.bfloat16),    # resident K (per batch element)
        pltpu.VMEM((N, C), jnp.bfloat16),    # resident V
        pltpu.VMEM((TQ, C), jnp.float32),    # lane-dense head-concat buffer
    ]

    kernel = functools.partial(_causal_attn_kernel, num_heads=num_heads)

    return pl.pallas_call(
        kernel,
        out_shape=out_shape,
        grid=(B, NQ),
        in_specs=in_specs,
        out_specs=out_specs,
        scratch_shapes=scratch_shapes,
        compiler_params=pltpu.CompilerParams(
            dimension_semantics=("parallel", "arbitrary"),
            vmem_limit_bytes=_vmem_limit_bytes()),
    )(x, x, wq_t, wkv_t, wp_t, wc_t, bp2, bc2)


def _reference_forward(x, wqkv, wp, bp, wc, bc, *, num_heads):
    """Pure-JAX (f32) re-implementation of the PyTorch forward (mask=None)."""
    B, N, C = x.shape
    hd = C // num_heads
    qkv = (x @ wqkv.T).reshape(B, N, 3, num_heads, hd).transpose(2, 0, 3, 1, 4)
    q, k, v = qkv[0], qkv[1], qkv[2]                      # (B, H, N, hd)
    attn = jnp.einsum('bhqd,bhkd->bhqk', q, k) * hd ** -0.5
    attn = jax.nn.softmax(attn, axis=-1)
    o = jnp.einsum('bhqk,bhkd->bhqd', attn, v)            # (B, H, N, hd)
    o = o.transpose(0, 2, 1, 3).reshape(B, N, C)
    xp = o @ wp.T + bp
    cf = xp @ wc.T + bc
    return xp, cf


if __name__ == "__main__":
    B, N, C = 2, 16, 128     # C multiple of 128 -> lane-dense stores
    NUM_HEADS = 8

    key = jax.random.PRNGKey(0)
    kx, kqkv, kwp, kbp, kwc, kbc = jax.random.split(key, 6)

    x = jax.random.normal(kx, (B, N, C), dtype=jnp.float32)
    # PyTorch Linear weight layout: (out, in).
    wqkv = jax.random.normal(kqkv, (3 * C, C), dtype=jnp.float32) * 0.05
    wp = jax.random.normal(kwp, (C, C), dtype=jnp.float32) * 0.05
    bp = jax.random.normal(kbp, (C,), dtype=jnp.float32) * 0.05
    wc = jax.random.normal(kwc, (C, C), dtype=jnp.float32) * 0.05
    bc = jax.random.normal(kbc, (C,), dtype=jnp.float32) * 0.05

    out, causal_features = causal_attention(
        x, wqkv, wp, bp, wc, bc, num_heads=NUM_HEADS)
    jax.block_until_ready((out, causal_features))

    ref_out, ref_cf = _reference_forward(
        x, wqkv, wp, bp, wc, bc, num_heads=NUM_HEADS)

    # bf16 MXU operands + approx reciprocal -> loosened tolerance vs the
    # f32 reference.
    assert jnp.allclose(out, ref_out, atol=2e-2, rtol=2e-2)
    assert jnp.allclose(causal_features, ref_cf, atol=2e-2, rtol=2e-2)

    print("KERNEL_OK")
</pallas_src>

<mosaic_0001>
module attributes {stable_mosaic.version = 11 : i64} {
  func.func @_causal_attn_kernel(%arg0: i32, %arg1: i32, %arg2: memref<1x16x128xf32, #tpu.memory_space<vmem>>, %arg3: memref<1x16x128xf32, #tpu.memory_space<vmem>>, %arg4: memref<128x128xbf16, #tpu.memory_space<vmem>>, %arg5: memref<128x256xbf16, #tpu.memory_space<vmem>>, %arg6: memref<128x128xbf16, #tpu.memory_space<vmem>>, %arg7: memref<128x128xbf16, #tpu.memory_space<vmem>>, %arg8: memref<1x128xf32, #tpu.memory_space<vmem>>, %arg9: memref<1x128xf32, #tpu.memory_space<vmem>>, %arg10: memref<1x16x128xf32, #tpu.memory_space<vmem>>, %arg11: memref<1x16x128xf32, #tpu.memory_space<vmem>>, %arg12: memref<16x128xbf16, #tpu.memory_space<vmem>>, %arg13: memref<16x128xbf16, #tpu.memory_space<vmem>>, %arg14: memref<16x128xf32, #tpu.memory_space<vmem>>) attributes {dimension_semantics = [#tpu.dimension_semantics<parallel>, #tpu.dimension_semantics<arbitrary>], iteration_bounds = array<i64: 2, 1>, scalar_prefetch = 0 : i64, scratch_operands = 3 : i64, tpu.core_type = #tpu.core_type<tc>, window_params = [{transform_indices = @transform_0, window_bounds = array<i64: 1, 16, 128>}, {transform_indices = @transform_1, window_bounds = array<i64: 1, 16, 128>}, {pipeline_mode = #tpu.pipeline_mode<synchronous>, transform_indices = @transform_2, window_bounds = array<i64: 128, 128>}, {pipeline_mode = #tpu.pipeline_mode<synchronous>, transform_indices = @transform_3, window_bounds = array<i64: 128, 256>}, {pipeline_mode = #tpu.pipeline_mode<synchronous>, transform_indices = @transform_4, window_bounds = array<i64: 128, 128>}, {pipeline_mode = #tpu.pipeline_mode<synchronous>, transform_indices = @transform_5, window_bounds = array<i64: 128, 128>}, {pipeline_mode = #tpu.pipeline_mode<synchronous>, transform_indices = @transform_6, window_bounds = array<i64: 1, 128>}, {pipeline_mode = #tpu.pipeline_mode<synchronous>, transform_indices = @transform_7, window_bounds = array<i64: 1, 128>}, {transform_indices = @transform_8, window_bounds = array<i64: 1, 16, 128>}, {transform_indices = @transform_9, window_bounds = array<i64: 1, 16, 128>}]} {
    %c0_i32 = arith.constant 0 : i32
    %0 = arith.cmpi eq, %arg1, %c0_i32 : i32
    %1 = arith.extui %0 : i1 to i32
    %c0_i32_0 = arith.constant 0 : i32
    %2 = arith.cmpi ne, %1, %c0_i32_0 : i32
    scf.if %2 {
      %c0_68 = arith.constant 0 : index
      %c0_69 = arith.constant 0 : index
      %c0_70 = arith.constant 0 : index
      %166 = vector.load %arg3[%c0_68, %c0_69, %c0_70] : memref<1x16x128xf32, #tpu.memory_space<vmem>>, vector<1x16x128xf32>
      %167 = vector.shape_cast %166 : vector<1x16x128xf32> to vector<16x128xf32>
      %168 = arith.truncf %167 : vector<16x128xf32> to vector<16x128xbf16>
      %c0_71 = arith.constant 0 : index
      %c0_72 = arith.constant 0 : index
      %169 = vector.load %arg5[%c0_71, %c0_72] : memref<128x256xbf16, #tpu.memory_space<vmem>>, vector<128x256xbf16>
      %cst_73 = arith.constant dense<0.000000e+00> : vector<16x256xf32>
      %170 = tpu.matmul %168, %169, %cst_73 {dimension_numbers = #tpu.dot_dimension_numbers<[1], [0], [0], [1], [0, 0, 1, 1], [], []>} : vector<16x128xbf16>, vector<128x256xbf16>, vector<16x256xf32> -> vector<16x256xf32>
      %171 = vector.extract_strided_slice %170 {offsets = [0, 0], sizes = [16, 128], strides = [1, 1]} : vector<16x256xf32> to vector<16x128xf32>
      %172 = arith.truncf %171 : vector<16x128xf32> to vector<16x128xbf16>
      %c0_74 = arith.constant 0 : index
      %c0_75 = arith.constant 0 : index
      %173 = vector.load %arg12[%c0_74, %c0_75] : memref<16x128xbf16, #tpu.memory_space<vmem>>, vector<16x128xbf16>
      tpu.vector_store %arg12[%c0_74, %c0_75], %172 {strides = array<i32>} : memref<16x128xbf16, #tpu.memory_space<vmem>>, vector<16x128xbf16>,
      %174 = vector.extract_strided_slice %170 {offsets = [0, 128], sizes = [16, 128], strides = [1, 1]} : vector<16x256xf32> to vector<16x128xf32>
      %175 = arith.truncf %174 : vector<16x128xf32> to vector<16x128xbf16>
      %c0_76 = arith.constant 0 : index
      %c0_77 = arith.constant 0 : index
      %176 = vector.load %arg13[%c0_76, %c0_77] : memref<16x128xbf16, #tpu.memory_space<vmem>>, vector<16x128xbf16>
      tpu.vector_store %arg13[%c0_76, %c0_77], %175 {strides = array<i32>} : memref<16x128xbf16, #tpu.memory_space<vmem>>, vector<16x128xbf16>,
    } else {
    }
    %c0 = arith.constant 0 : index
    %c0_1 = arith.constant 0 : index
    %c0_2 = arith.constant 0 : index
    %3 = vector.load %arg2[%c0, %c0_1, %c0_2] : memref<1x16x128xf32, #tpu.memory_space<vmem>>, vector<1x16x128xf32>
    %4 = vector.shape_cast %3 : vector<1x16x128xf32> to vector<16x128xf32>
    %5 = arith.truncf %4 : vector<16x128xf32> to vector<16x128xbf16>
    %c0_3 = arith.constant 0 : index
    %c0_4 = arith.constant 0 : index
    %6 = vector.load %arg4[%c0_3, %c0_4] : memref<128x128xbf16, #tpu.memory_space<vmem>>, vector<128x128xbf16>
    %cst = arith.constant dense<0.000000e+00> : vector<16x128xf32>
    %7 = tpu.matmul %5, %6, %cst {dimension_numbers = #tpu.dot_dimension_numbers<[1], [0], [0], [1], [0, 0, 1, 1], [], []>} : vector<16x128xbf16>, vector<128x128xbf16>, vector<16x128xf32> -> vector<16x128xf32>
    %8 = arith.truncf %7 : vector<16x128xf32> to vector<16x128xbf16>
    %c0_5 = arith.constant 0 : index
    %c0_6 = arith.constant 0 : index
    %9 = vector.load %arg12[%c0_5, %c0_6] : memref<16x128xbf16, #tpu.memory_space<vmem>>, vector<16x128xbf16>
    %c0_7 = arith.constant 0 : index
    %c0_8 = arith.constant 0 : index
    %10 = vector.load %arg13[%c0_7, %c0_8] : memref<16x128xbf16, #tpu.memory_space<vmem>>, vector<16x128xbf16>
    %11 = vector.extract_strided_slice %8 {offsets = [0, 0], sizes = [16, 16], strides = [1, 1]} : vector<16x128xbf16> to vector<16x16xbf16>
    %12 = vector.extract_strided_slice %9 {offsets = [0, 0], sizes = [16, 16], strides = [1, 1]} : vector<16x128xbf16> to vector<16x16xbf16>
    %13 = vector.extract_strided_slice %10 {offsets = [0, 0], sizes = [16, 16], strides = [1, 1]} : vector<16x128xbf16> to vector<16x16xbf16>
    "tpu.trace_start"() <{level = 10 : i32, message = "qd,kd->qk"}> : () -> ()
    %cst_9 = arith.constant dense<0.000000e+00> : vector<16x16xf32>
    %14 = tpu.matmul %11, %12, %cst_9 {dimension_numbers = #tpu.dot_dimension_numbers<[1], [1], [0], [0], [0, 0, 1, 0], [], []>} : vector<16x16xbf16>, vector<16x16xbf16>, vector<16x16xf32> -> vector<16x16xf32>
    "tpu.trace_stop"() : () -> ()
    %cst_10 = arith.constant dense<0xFF800000> : vector<16xf32>
    %15 = vector.multi_reduction <maximumf>, %14, %cst_10 [1] : vector<16x16xf32> to vector<16xf32>
    %16 = vector.shape_cast %15 : vector<16xf32> to vector<16x1xf32>
    %17 = vector.broadcast %16 : vector<16x1xf32> to vector<16x16xf32>
    %18 = arith.subf %14, %17 : vector<16x16xf32>
    %19 = math.exp %18 : vector<16x16xf32>
    %cst_11 = arith.constant dense<0.000000e+00> : vector<16xf32>
    %20 = vector.multi_reduction <add>, %19, %cst_11 [1] : vector<16x16xf32> to vector<16xf32>
    %21 = vector.shape_cast %20 : vector<16xf32> to vector<16x1xf32>
    %22 = tpu.reciprocal %21 {approx = true} : vector<16x1xf32> -> vector<16x1xf32>
    %23 = vector.broadcast %22 : vector<16x1xf32> to vector<16x16xf32>
    %24 = arith.mulf %19, %23 : vector<16x16xf32>
    %25 = arith.truncf %24 : vector<16x16xf32> to vector<16x16xbf16>
    %cst_12 = arith.constant dense<0.000000e+00> : vector<16x16xf32>
    %26 = tpu.matmul %25, %13, %cst_12 {dimension_numbers = #tpu.dot_dimension_numbers<[1], [0], [0], [1], [0, 0, 1, 1], [], []>} : vector<16x16xbf16>, vector<16x16xbf16>, vector<16x16xf32> -> vector<16x16xf32>
    %c0_13 = arith.constant 0 : index
    %c0_14 = arith.constant 0 : index
    %27 = vector.load %arg14[%c0_13, %c0_14] : memref<16x128xf32, #tpu.memory_space<vmem>>, vector<16x16xf32>
    tpu.vector_store %arg14[%c0_13, %c0_14], %26 {strides = array<i32>} : memref<16x128xf32, #tpu.memory_space<vmem>>, vector<16x16xf32>,
    %28 = vector.extract_strided_slice %8 {offsets = [0, 16], sizes = [16, 16], strides = [1, 1]} : vector<16x128xbf16> to vector<16x16xbf16>
    %29 = vector.extract_strided_slice %9 {offsets = [0, 16], sizes = [16, 16], strides = [1, 1]} : vector<16x128xbf16> to vector<16x16xbf16>
    %30 = vector.extract_strided_slice %10 {offsets = [0, 16], sizes = [16, 16], strides = [1, 1]} : vector<16x128xbf16> to vector<16x16xbf16>
    "tpu.trace_start"() <{level = 10 : i32, message = "qd,kd->qk"}> : () -> ()
    %cst_15 = arith.constant dense<0.000000e+00> : vector<16x16xf32>
    %31 = tpu.matmul %28, %29, %cst_15 {dimension_numbers = #tpu.dot_dimension_numbers<[1], [1], [0], [0], [0, 0, 1, 0], [], []>} : vector<16x16xbf16>, vector<16x16xbf16>, vector<16x16xf32> -> vector<16x16xf32>
    "tpu.trace_stop"() : () -> ()
    %cst_16 = arith.constant dense<0xFF800000> : vector<16xf32>
    %32 = vector.multi_reduction <maximumf>, %31, %cst_16 [1] : vector<16x16xf32> to vector<16xf32>
    %33 = vector.shape_cast %32 : vector<16xf32> to vector<16x1xf32>
    %34 = vector.broadcast %33 : vector<16x1xf32> to vector<16x16xf32>
    %35 = arith.subf %31, %34 : vector<16x16xf32>
    %36 = math.exp %35 : vector<16x16xf32>
    %cst_17 = arith.constant dense<0.000000e+00> : vector<16xf32>
    %37 = vector.multi_reduction <add>, %36, %cst_17 [1] : vector<16x16xf32> to vector<16xf32>
    %38 = vector.shape_cast %37 : vector<16xf32> to vector<16x1xf32>
    %39 = tpu.reciprocal %38 {approx = true} : vector<16x1xf32> -> vector<16x1xf32>
    %40 = vector.broadcast %39 : vector<16x1xf32> to vector<16x16xf32>
    %41 = arith.mulf %36, %40 : vector<16x16xf32>
    %42 = arith.truncf %41 : vector<16x16xf32> to vector<16x16xbf16>
    %cst_18 = arith.constant dense<0.000000e+00> : vector<16x16xf32>
    %43 = tpu.matmul %42, %30, %cst_18 {dimension_numbers = #tpu.dot_dimension_numbers<[1], [0], [0], [1], [0, 0, 1, 1], [], []>} : vector<16x16xbf16>, vector<16x16xbf16>, vector<16x16xf32> -> vector<16x16xf32>
    %c0_19 = arith.constant 0 : index
    %c16 = arith.constant 16 : index
    %44 = vector.load %arg14[%c0_19, %c16] : memref<16x128xf32, #tpu.memory_space<vmem>>, vector<16x16xf32>
    tpu.vector_store %arg14[%c0_19, %c16], %43 {strides = array<i32>} : memref<16x128xf32, #tpu.memory_space<vmem>>, vector<16x16xf32>,
    %45 = vector.extract_strided_slice %8 {offsets = [0, 32], sizes = [16, 16], strides = [1, 1]} : vector<16x128xbf16> to vector<16x16xbf16>
    %46 = vector.extract_strided_slice %9 {offsets = [0, 32], sizes = [16, 16], strides = [1, 1]} : vector<16x128xbf16> to vector<16x16xbf16>
    %47 = vector.extract_strided_slice %10 {offsets = [0, 32], sizes = [16, 16], strides = [1, 1]} : vector<16x128xbf16> to vector<16x16xbf16>
    "tpu.trace_start"() <{level = 10 : i32, message = "qd,kd->qk"}> : () -> ()
    %cst_20 = arith.constant dense<0.000000e+00> : vector<16x16xf32>
    %48 = tpu.matmul %45, %46, %cst_20 {dimension_numbers = #tpu.dot_dimension_numbers<[1], [1], [0], [0], [0, 0, 1, 0], [], []>} : vector<16x16xbf16>, vector<16x16xbf16>, vector<16x16xf32> -> vector<16x16xf32>
    "tpu.trace_stop"() : () -> ()
    %cst_21 = arith.constant dense<0xFF800000> : vector<16xf32>
    %49 = vector.multi_reduction <maximumf>, %48, %cst_21 [1] : vector<16x16xf32> to vector<16xf32>
    %50 = vector.shape_cast %49 : vector<16xf32> to vector<16x1xf32>
    %51 = vector.broadcast %50 : vector<16x1xf32> to vector<16x16xf32>
    %52 = arith.subf %48, %51 : vector<16x16xf32>
    %53 = math.exp %52 : vector<16x16xf32>
    %cst_22 = arith.constant dense<0.000000e+00> : vector<16xf32>
    %54 = vector.multi_reduction <add>, %53, %cst_22 [1] : vector<16x16xf32> to vector<16xf32>
    %55 = vector.shape_cast %54 : vector<16xf32> to vector<16x1xf32>
    %56 = tpu.reciprocal %55 {approx = true} : vector<16x1xf32> -> vector<16x1xf32>
    %57 = vector.broadcast %56 : vector<16x1xf32> to vector<16x16xf32>
    %58 = arith.mulf %53, %57 : vector<16x16xf32>
    %59 = arith.truncf %58 : vector<16x16xf32> to vector<16x16xbf16>
    %cst_23 = arith.constant dense<0.000000e+00> : vector<16x16xf32>
    %60 = tpu.matmul %59, %47, %cst_23 {dimension_numbers = #tpu.dot_dimension_numbers<[1], [0], [0], [1], [0, 0, 1, 1], [], []>} : vector<16x16xbf16>, vector<16x16xbf16>, vector<16x16xf32> -> vector<16x16xf32>
    %c0_24 = arith.constant 0 : index
    %c32 = arith.constant 32 : index
    %61 = vector.load %arg14[%c0_24, %c32] : memref<16x128xf32, #tpu.memory_space<vmem>>, vector<16x16xf32>
    tpu.vector_store %arg14[%c0_24, %c32], %60 {strides = array<i32>} : memref<16x128xf32, #tpu.memory_space<vmem>>, vector<16x16xf32>,
    %62 = vector.extract_strided_slice %8 {offsets = [0, 48], sizes = [16, 16], strides = [1, 1]} : vector<16x128xbf16> to vector<16x16xbf16>
    %63 = vector.extract_strided_slice %9 {offsets = [0, 48], sizes = [16, 16], strides = [1, 1]} : vector<16x128xbf16> to vector<16x16xbf16>
    %64 = vector.extract_strided_slice %10 {offsets = [0, 48], sizes = [16, 16], strides = [1, 1]} : vector<16x128xbf16> to vector<16x16xbf16>
    "tpu.trace_start"() <{level = 10 : i32, message = "qd,kd->qk"}> : () -> ()
    %cst_25 = arith.constant dense<0.000000e+00> : vector<16x16xf32>
    %65 = tpu.matmul %62, %63, %cst_25 {dimension_numbers = #tpu.dot_dimension_numbers<[1], [1], [0], [0], [0, 0, 1, 0], [], []>} : vector<16x16xbf16>, vector<16x16xbf16>, vector<16x16xf32> -> vector<16x16xf32>
    "tpu.trace_stop"() : () -> ()
    %cst_26 = arith.constant dense<0xFF800000> : vector<16xf32>
    %66 = vector.multi_reduction <maximumf>, %65, %cst_26 [1] : vector<16x16xf32> to vector<16xf32>
    %67 = vector.shape_cast %66 : vector<16xf32> to vector<16x1xf32>
    %68 = vector.broadcast %67 : vector<16x1xf32> to vector<16x16xf32>
    %69 = arith.subf %65, %68 : vector<16x16xf32>
    %70 = math.exp %69 : vector<16x16xf32>
    %cst_27 = arith.constant dense<0.000000e+00> : vector<16xf32>
    %71 = vector.multi_reduction <add>, %70, %cst_27 [1] : vector<16x16xf32> to vector<16xf32>
    %72 = vector.shape_cast %71 : vector<16xf32> to vector<16x1xf32>
    %73 = tpu.reciprocal %72 {approx = true} : vector<16x1xf32> -> vector<16x1xf32>
    %74 = vector.broadcast %73 : vector<16x1xf32> to vector<16x16xf32>
    %75 = arith.mulf %70, %74 : vector<16x16xf32>
    %76 = arith.truncf %75 : vector<16x16xf32> to vector<16x16xbf16>
    %cst_28 = arith.constant dense<0.000000e+00> : vector<16x16xf32>
    %77 = tpu.matmul %76, %64, %cst_28 {dimension_numbers = #tpu.dot_dimension_numbers<[1], [0], [0], [1], [0, 0, 1, 1], [], []>} : vector<16x16xbf16>, vector<16x16xbf16>, vector<16x16xf32> -> vector<16x16xf32>
    %c0_29 = arith.constant 0 : index
    %c48 = arith.constant 48 : index
    %78 = vector.load %arg14[%c0_29, %c48] : memref<16x128xf32, #tpu.memory_space<vmem>>, vector<16x16xf32>
    tpu.vector_store %arg14[%c0_29, %c48], %77 {strides = array<i32>} : memref<16x128xf32, #tpu.memory_space<vmem>>, vector<16x16xf32>,
    %79 = vector.extract_strided_slice %8 {offsets = [0, 64], sizes = [16, 16], strides = [1, 1]} : vector<16x128xbf16> to vector<16x16xbf16>
    %80 = vector.extract_strided_slice %9 {offsets = [0, 64], sizes = [16, 16], strides = [1, 1]} : vector<16x128xbf16> to vector<16x16xbf16>
    %81 = vector.extract_strided_slice %10 {offsets = [0, 64], sizes = [16, 16], strides = [1, 1]} : vector<16x128xbf16> to vector<16x16xbf16>
    "tpu.trace_start"() <{level = 10 : i32, message = "qd,kd->qk"}> : () -> ()
    %cst_30 = arith.constant dense<0.000000e+00> : vector<16x16xf32>
    %82 = tpu.matmul %79, %80, %cst_30 {dimension_numbers = #tpu.dot_dimension_numbers<[1], [1], [0], [0], [0, 0, 1, 0], [], []>} : vector<16x16xbf16>, vector<16x16xbf16>, vector<16x16xf32> -> vector<16x16xf32>
    "tpu.trace_stop"() : () -> ()
    %cst_31 = arith.constant dense<0xFF800000> : vector<16xf32>
    %83 = vector.multi_reduction <maximumf>, %82, %cst_31 [1] : vector<16x16xf32> to vector<16xf32>
    %84 = vector.shape_cast %83 : vector<16xf32> to vector<16x1xf32>
    %85 = vector.broadcast %84 : vector<16x1xf32> to vector<16x16xf32>
    %86 = arith.subf %82, %85 : vector<16x16xf32>
    %87 = math.exp %86 : vector<16x16xf32>
    %cst_32 = arith.constant dense<0.000000e+00> : vector<16xf32>
    %88 = vector.multi_reduction <add>, %87, %cst_32 [1] : vector<16x16xf32> to vector<16xf32>
    %89 = vector.shape_cast %88 : vector<16xf32> to vector<16x1xf32>
    %90 = tpu.reciprocal %89 {approx = true} : vector<16x1xf32> -> vector<16x1xf32>
    %91 = vector.broadcast %90 : vector<16x1xf32> to vector<16x16xf32>
    %92 = arith.mulf %87, %91 : vector<16x16xf32>
    %93 = arith.truncf %92 : vector<16x16xf32> to vector<16x16xbf16>
    %cst_33 = arith.constant dense<0.000000e+00> : vector<16x16xf32>
    %94 = tpu.matmul %93, %81, %cst_33 {dimension_numbers = #tpu.dot_dimension_numbers<[1], [0], [0], [1], [0, 0, 1, 1], [], []>} : vector<16x16xbf16>, vector<16x16xbf16>, vector<16x16xf32> -> vector<16x16xf32>
    %c0_34 = arith.constant 0 : index
    %c64 = arith.constant 64 : index
    %95 = vector.load %arg14[%c0_34, %c64] : memref<16x128xf32, #tpu.memory_space<vmem>>, vector<16x16xf32>
    tpu.vector_store %arg14[%c0_34, %c64], %94 {strides = array<i32>} : memref<16x128xf32, #tpu.memory_space<vmem>>, vector<16x16xf32>,
    %96 = vector.extract_strided_slice %8 {offsets = [0, 80], sizes = [16, 16], strides = [1, 1]} : vector<16x128xbf16> to vector<16x16xbf16>
    %97 = vector.extract_strided_slice %9 {offsets = [0, 80], sizes = [16, 16], strides = [1, 1]} : vector<16x128xbf16> to vector<16x16xbf16>
    %98 = vector.extract_strided_slice %10 {offsets = [0, 80], sizes = [16, 16], strides = [1, 1]} : vector<16x128xbf16> to vector<16x16xbf16>
    "tpu.trace_start"() <{level = 10 : i32, message = "qd,kd->qk"}> : () -> ()
    %cst_35 = arith.constant dense<0.000000e+00> : vector<16x16xf32>
    %99 = tpu.matmul %96, %97, %cst_35 {dimension_numbers = #tpu.dot_dimension_numbers<[1], [1], [0], [0], [0, 0, 1, 0], [], []>} : vector<16x16xbf16>, vector<16x16xbf16>, vector<16x16xf32> -> vector<16x16xf32>
    "tpu.trace_stop"() : () -> ()
    %cst_36 = arith.constant dense<0xFF800000> : vector<16xf32>
    %100 = vector.multi_reduction <maximumf>, %99, %cst_36 [1] : vector<16x16xf32> to vector<16xf32>
    %101 = vector.shape_cast %100 : vector<16xf32> to vector<16x1xf32>
    %102 = vector.broadcast %101 : vector<16x1xf32> to vector<16x16xf32>
    %103 = arith.subf %99, %102 : vector<16x16xf32>
    %104 = math.exp %103 : vector<16x16xf32>
    %cst_37 = arith.constant dense<0.000000e+00> : vector<16xf32>
    %105 = vector.multi_reduction <add>, %104, %cst_37 [1] : vector<16x16xf32> to vector<16xf32>
    %106 = vector.shape_cast %105 : vector<16xf32> to vector<16x1xf32>
    %107 = tpu.reciprocal %106 {approx = true} : vector<16x1xf32> -> vector<16x1xf32>
    %108 = vector.broadcast %107 : vector<16x1xf32> to vector<16x16xf32>
    %109 = arith.mulf %104, %108 : vector<16x16xf32>
    %110 = arith.truncf %109 : vector<16x16xf32> to vector<16x16xbf16>
    %cst_38 = arith.constant dense<0.000000e+00> : vector<16x16xf32>
    %111 = tpu.matmul %110, %98, %cst_38 {dimension_numbers = #tpu.dot_dimension_numbers<[1], [0], [0], [1], [0, 0, 1, 1], [], []>} : vector<16x16xbf16>, vector<16x16xbf16>, vector<16x16xf32> -> vector<16x16xf32>
    %c0_39 = arith.constant 0 : index
    %c80 = arith.constant 80 : index
    %112 = vector.load %arg14[%c0_39, %c80] : memref<16x128xf32, #tpu.memory_space<vmem>>, vector<16x16xf32>
    tpu.vector_store %arg14[%c0_39, %c80], %111 {strides = array<i32>} : memref<16x128xf32, #tpu.memory_space<vmem>>, vector<16x16xf32>,
    %113 = vector.extract_strided_slice %8 {offsets = [0, 96], sizes = [16, 16], strides = [1, 1]} : vector<16x128xbf16> to vector<16x16xbf16>
    %114 = vector.extract_strided_slice %9 {offsets = [0, 96], sizes = [16, 16], strides = [1, 1]} : vector<16x128xbf16> to vector<16x16xbf16>
    %115 = vector.extract_strided_slice %10 {offsets = [0, 96], sizes = [16, 16], strides = [1, 1]} : vector<16x128xbf16> to vector<16x16xbf16>
    "tpu.trace_start"() <{level = 10 : i32, message = "qd,kd->qk"}> : () -> ()
    %cst_40 = arith.constant dense<0.000000e+00> : vector<16x16xf32>
    %116 = tpu.matmul %113, %114, %cst_40 {dimension_numbers = #tpu.dot_dimension_numbers<[1], [1], [0], [0], [0, 0, 1, 0], [], []>} : vector<16x16xbf16>, vector<16x16xbf16>, vector<16x16xf32> -> vector<16x16xf32>
    "tpu.trace_stop"() : () -> ()
    %cst_41 = arith.constant dense<0xFF800000> : vector<16xf32>
    %117 = vector.multi_reduction <maximumf>, %116, %cst_41 [1] : vector<16x16xf32> to vector<16xf32>
    %118 = vector.shape_cast %117 : vector<16xf32> to vector<16x1xf32>
    %119 = vector.broadcast %118 : vector<16x1xf32> to vector<16x16xf32>
    %120 = arith.subf %116, %119 : vector<16x16xf32>
    %121 = math.exp %120 : vector<16x16xf32>
    %cst_42 = arith.constant dense<0.000000e+00> : vector<16xf32>
    %122 = vector.multi_reduction <add>, %121, %cst_42 [1] : vector<16x16xf32> to vector<16xf32>
    %123 = vector.shape_cast %122 : vector<16xf32> to vector<16x1xf32>
    %124 = tpu.reciprocal %123 {approx = true} : vector<16x1xf32> -> vector<16x1xf32>
    %125 = vector.broadcast %124 : vector<16x1xf32> to vector<16x16xf32>
    %126 = arith.mulf %121, %125 : vector<16x16xf32>
    %127 = arith.truncf %126 : vector<16x16xf32> to vector<16x16xbf16>
    %cst_43 = arith.constant dense<0.000000e+00> : vector<16x16xf32>
    %128 = tpu.matmul %127, %115, %cst_43 {dimension_numbers = #tpu.dot_dimension_numbers<[1], [0], [0], [1], [0, 0, 1, 1], [], []>} : vector<16x16xbf16>, vector<16x16xbf16>, vector<16x16xf32> -> vector<16x16xf32>
    %c0_44 = arith.constant 0 : index
    %c96 = arith.constant 96 : index
    %129 = vector.load %arg14[%c0_44, %c96] : memref<16x128xf32, #tpu.memory_space<vmem>>, vector<16x16xf32>
    tpu.vector_store %arg14[%c0_44, %c96], %128 {strides = array<i32>} : memref<16x128xf32, #tpu.memory_space<vmem>>, vector<16x16xf32>,
    %130 = vector.extract_strided_slice %8 {offsets = [0, 112], sizes = [16, 16], strides = [1, 1]} : vector<16x128xbf16> to vector<16x16xbf16>
    %131 = vector.extract_strided_slice %9 {offsets = [0, 112], sizes = [16, 16], strides = [1, 1]} : vector<16x128xbf16> to vector<16x16xbf16>
    %132 = vector.extract_strided_slice %10 {offsets = [0, 112], sizes = [16, 16], strides = [1, 1]} : vector<16x128xbf16> to vector<16x16xbf16>
    "tpu.trace_start"() <{level = 10 : i32, message = "qd,kd->qk"}> : () -> ()
    %cst_45 = arith.constant dense<0.000000e+00> : vector<16x16xf32>
    %133 = tpu.matmul %130, %131, %cst_45 {dimension_numbers = #tpu.dot_dimension_numbers<[1], [1], [0], [0], [0, 0, 1, 0], [], []>} : vector<16x16xbf16>, vector<16x16xbf16>, vector<16x16xf32> -> vector<16x16xf32>
    "tpu.trace_stop"() : () -> ()
    %cst_46 = arith.constant dense<0xFF800000> : vector<16xf32>
    %134 = vector.multi_reduction <maximumf>, %133, %cst_46 [1] : vector<16x16xf32> to vector<16xf32>
    %135 = vector.shape_cast %134 : vector<16xf32> to vector<16x1xf32>
    %136 = vector.broadcast %135 : vector<16x1xf32> to vector<16x16xf32>
    %137 = arith.subf %133, %136 : vector<16x16xf32>
    %138 = math.exp %137 : vector<16x16xf32>
    %cst_47 = arith.constant dense<0.000000e+00> : vector<16xf32>
    %139 = vector.multi_reduction <add>, %138, %cst_47 [1] : vector<16x16xf32> to vector<16xf32>
    %140 = vector.shape_cast %139 : vector<16xf32> to vector<16x1xf32>
    %141 = tpu.reciprocal %140 {approx = true} : vector<16x1xf32> -> vector<16x1xf32>
    %142 = vector.broadcast %141 : vector<16x1xf32> to vector<16x16xf32>
    %143 = arith.mulf %138, %142 : vector<16x16xf32>
    %144 = arith.truncf %143 : vector<16x16xf32> to vector<16x16xbf16>
    %cst_48 = arith.constant dense<0.000000e+00> : vector<16x16xf32>
    %145 = tpu.matmul %144, %132, %cst_48 {dimension_numbers = #tpu.dot_dimension_numbers<[1], [0], [0], [1], [0, 0, 1, 1], [], []>} : vector<16x16xbf16>, vector<16x16xbf16>, vector<16x16xf32> -> vector<16x16xf32>
    %c0_49 = arith.constant 0 : index
    %c112 = arith.constant 112 : index
    %146 = vector.load %arg14[%c0_49, %c112] : memref<16x128xf32, #tpu.memory_space<vmem>>, vector<16x16xf32>
    tpu.vector_store %arg14[%c0_49, %c112], %145 {strides = array<i32>} : memref<16x128xf32, #tpu.memory_space<vmem>>, vector<16x16xf32>,
    %c0_50 = arith.constant 0 : index
    %c0_51 = arith.constant 0 : index
    %147 = vector.load %arg14[%c0_50, %c0_51] : memref<16x128xf32, #tpu.memory_space<vmem>>, vector<16x128xf32>
    %148 = arith.truncf %147 : vector<16x128xf32> to vector<16x128xbf16>
    %c0_52 = arith.constant 0 : index
    %c0_53 = arith.constant 0 : index
    %149 = vector.load %arg6[%c0_52, %c0_53] : memref<128x128xbf16, #tpu.memory_space<vmem>>, vector<128x128xbf16>
    %cst_54 = arith.constant dense<0.000000e+00> : vector<16x128xf32>
    %150 = tpu.matmul %148, %149, %cst_54 {dimension_numbers = #tpu.dot_dimension_numbers<[1], [0], [0], [1], [0, 0, 1, 1], [], []>} : vector<16x128xbf16>, vector<128x128xbf16>, vector<16x128xf32> -> vector<16x128xf32>
    %c0_55 = arith.constant 0 : index
    %c0_56 = arith.constant 0 : index
    %151 = vector.load %arg8[%c0_55, %c0_56] : memref<1x128xf32, #tpu.memory_space<vmem>>, vector<1x128xf32>
    %152 = vector.broadcast %151 : vector<1x128xf32> to vector<16x128xf32>
    %153 = arith.addf %150, %152 : vector<16x128xf32>
    %154 = arith.truncf %153 : vector<16x128xf32> to vector<16x128xbf16>
    %c0_57 = arith.constant 0 : index
    %c0_58 = arith.constant 0 : index
    %155 = vector.load %arg7[%c0_57, %c0_58] : memref<128x128xbf16, #tpu.memory_space<vmem>>, vector<128x128xbf16>
    %cst_59 = arith.constant dense<0.000000e+00> : vector<16x128xf32>
    %156 = tpu.matmul %154, %155, %cst_59 {dimension_numbers = #tpu.dot_dimension_numbers<[1], [0], [0], [1], [0, 0, 1, 1], [], []>} : vector<16x128xbf16>, vector<128x128xbf16>, vector<16x128xf32> -> vector<16x128xf32>
    %c0_60 = arith.constant 0 : index
    %c0_61 = arith.constant 0 : index
    %157 = vector.load %arg9[%c0_60, %c0_61] : memref<1x128xf32, #tpu.memory_space<vmem>>, vector<1x128xf32>
    %158 = vector.broadcast %157 : vector<1x128xf32> to vector<16x128xf32>
    %159 = arith.addf %156, %158 : vector<16x128xf32>
    %c0_62 = arith.constant 0 : index
    %c0_63 = arith.constant 0 : index
    %c0_64 = arith.constant 0 : index
    %160 = vector.load %arg10[%c0_62, %c0_63, %c0_64] : memref<1x16x128xf32, #tpu.memory_space<vmem>>, vector<1x16x128xf32>
    %161 = vector.shape_cast %160 : vector<1x16x128xf32> to vector<16x128xf32>
    %162 = vector.shape_cast %153 : vector<16x128xf32> to vector<1x16x128xf32>
    tpu.vector_store %arg10[%c0_62, %c0_63, %c0_64], %162 {strides = array<i32>} : memref<1x16x128xf32, #tpu.memory_space<vmem>>, vector<1x16x128xf32>,
    %c0_65 = arith.constant 0 : index
    %c0_66 = arith.constant 0 : index
    %c0_67 = arith.constant 0 : index
    %163 = vector.load %arg11[%c0_65, %c0_66, %c0_67] : memref<1x16x128xf32, #tpu.memory_space<vmem>>, vector<1x16x128xf32>
    %164 = vector.shape_cast %163 : vector<1x16x128xf32> to vector<16x128xf32>
    %165 = vector.shape_cast %159 : vector<16x128xf32> to vector<1x16x128xf32>
    tpu.vector_store %arg11[%c0_65, %c0_66, %c0_67], %165 {strides = array<i32>} : memref<1x16x128xf32, #tpu.memory_space<vmem>>, vector<1x16x128xf32>,
    return
  }
  func.func @transform_0(%arg0: i32, %arg1: i32) -> (i32, i32, i32) {
    %c0_i32 = arith.constant 0 : i32
    %c0_i32_0 = arith.constant 0 : i32
    return %arg0, %arg1, %c0_i32 : i32, i32, i32
  }
  func.func @transform_1(%arg0: i32, %arg1: i32) -> (i32, i32, i32) {
    %c0_i32 = arith.constant 0 : i32
    %c0_i32_0 = arith.constant 0 : i32
    %c0_i32_1 = arith.constant 0 : i32
    return %arg0, %c0_i32, %c0_i32_0 : i32, i32, i32
  }
  func.func @transform_2(%arg0: i32, %arg1: i32) -> (i32, i32) {
    %c0_i32 = arith.constant 0 : i32
    %c0_i32_0 = arith.constant 0 : i32
    %c0_i32_1 = arith.constant 0 : i32
    return %c0_i32, %c0_i32_0 : i32, i32
  }
  func.func @transform_3(%arg0: i32, %arg1: i32) -> (i32, i32) {
    %c0_i32 = arith.constant 0 : i32
    %c0_i32_0 = arith.constant 0 : i32
    %c0_i32_1 = arith.constant 0 : i32
    return %c0_i32, %c0_i32_0 : i32, i32
  }
  func.func @transform_4(%arg0: i32, %arg1: i32) -> (i32, i32) {
    %c0_i32 = arith.constant 0 : i32
    %c0_i32_0 = arith.constant 0 : i32
    %c0_i32_1 = arith.constant 0 : i32
    return %c0_i32, %c0_i32_0 : i32, i32
  }
  func.func @transform_5(%arg0: i32, %arg1: i32) -> (i32, i32) {
    %c0_i32 = arith.constant 0 : i32
    %c0_i32_0 = arith.constant 0 : i32
    %c0_i32_1 = arith.constant 0 : i32
    return %c0_i32, %c0_i32_0 : i32, i32
  }
  func.func @transform_6(%arg0: i32, %arg1: i32) -> (i32, i32) {
    %c0_i32 = arith.constant 0 : i32
    %c0_i32_0 = arith.constant 0 : i32
    %c0_i32_1 = arith.constant 0 : i32
    return %c0_i32, %c0_i32_0 : i32, i32
  }
  func.func @transform_7(%arg0: i32, %arg1: i32) -> (i32, i32) {
    %c0_i32 = arith.constant 0 : i32
    %c0_i32_0 = arith.constant 0 : i32
    %c0_i32_1 = arith.constant 0 : i32
    return %c0_i32, %c0_i32_0 : i32, i32
  }
  func.func @transform_8(%arg0: i32, %arg1: i32) -> (i32, i32, i32) {
    %c0_i32 = arith.constant 0 : i32
    %c0_i32_0 = arith.constant 0 : i32
    return %arg0, %arg1, %c0_i32 : i32, i32, i32
  }
  func.func @transform_9(%arg0: i32, %arg1: i32) -> (i32, i32, i32) {
    %c0_i32 = arith.constant 0 : i32
    %c0_i32_0 = arith.constant 0 : i32
    return %arg0, %arg1, %c0_i32 : i32, i32, i32
  }
}

</mosaic_0001>

<llo_original>
// kernel: tpu_custom_call.1
$region0: #{tpu_custom_call.1}
  #allocation0 [shape = 'u32[]', space=smem, size = 0x4, offset = 0x4, fixed_abs, tag = 'smem constant byte address 0x4 - core index']
  #allocation1 [shape = 'u32[144,128]{1,0:T(1,128)}', space=vmem, size = 0x12000, scoped, tag = 'internal scratch']
  #allocation2 [shape = 'bf16[16,128]{1,0:T(8,128)(2,1)}', space=vmem, size = 0x1000, scoped, tag = 'scratch operand']
  #allocation3 [shape = 'bf16[16,128]{1,0:T(8,128)(2,1)}', space=vmem, size = 0x1000, scoped, tag = 'scratch operand']
  #allocation4 [shape = 'f32[16,128]{1,0:T(8,128)}', space=vmem, size = 0x2000, scoped, tag = 'scratch operand']
  %s0 = inlined_call_operand.hbm [shape: f32[2,16,128], index: 0, kind: input, shape index: {}]
  %s1 = inlined_call_operand.hbm [shape: f32[2,16,128], index: 1, kind: input, shape index: {}]
  %s2 = inlined_call_operand.hbm [shape: bf16[128,128], index: 2, kind: input, shape index: {}]
  %s3 = inlined_call_operand.hbm [shape: bf16[128,256], index: 3, kind: input, shape index: {}]
  %s4 = inlined_call_operand.hbm [shape: bf16[128,128], index: 4, kind: input, shape index: {}]
  %s5 = inlined_call_operand.hbm [shape: bf16[128,128], index: 5, kind: input, shape index: {}]
  %s6 = inlined_call_operand.vmem [shape: f32[1,128], index: 6, kind: input, shape index: {}]
  %s7 = inlined_call_operand.vmem [shape: f32[1,128], index: 7, kind: input, shape index: {}]
  %s8 = inlined_call_operand.hbm [shape: f32[2,16,128], index: 8, kind: output, shape index: {0}]
  %s9 = inlined_call_operand.hbm [shape: f32[2,16,128], index: 9, kind: output, shape index: {1}]
  %10 = xla_tuple %s8, %s9
  %s11 = sld [smem:[#allocation0]]
  $region101: #{tpu_custom_call.1} parent=0
    _
  %s13 = ssub.s32 1, %s11
  %s14 = scalar_select 0, %s13, %s11
  $region1: #{tpu_custom_call.1} parent=0
    #allocation5 [shape = 'u8[16384]{0}', space=vmem, size = 0x4000, scoped, tag = 'input window, operand 0']
    #allocation6 [shape = 's32[2]{0}', space=sflag, size = 0x8, scoped, tag = 'scoped memory for tpu_custom_call.1']
    #allocation7 [shape = 's32[2]{0}', space=sflag, size = 0x8, scoped, tag = 'scoped memory for tpu_custom_call.1']
    #allocation8 [shape = 'u8[16384]{0}', space=vmem, size = 0x4000, scoped, tag = 'input window, operand 1']
    #allocation9 [shape = 's32[2]{0}', space=sflag, size = 0x8, scoped, tag = 'scoped memory for tpu_custom_call.1']
    #allocation10 [shape = 'u8[32768]{0}', space=vmem, size = 0x8000, scoped, tag = 'input window, operand 2, single buffered']
    #allocation11 [shape = 'u8[65536]{0}', space=vmem, size = 0x10000, scoped, tag = 'input window, operand 3, single buffered']
    #allocation12 [shape = 's32[1]{0}', space=sflag, size = 0x4, scoped, tag = 'scoped memory for tpu_custom_call.1']
    #allocation13 [shape = 'u8[32768]{0}', space=vmem, size = 0x8000, scoped, tag = 'input window, operand 4, single buffered']
    #allocation14 [shape = 'u8[32768]{0}', space=vmem, size = 0x8000, scoped, tag = 'input window, operand 5, single buffered']
    #allocation15 [shape = 's32[1]{0}', space=sflag, size = 0x4, scoped, tag = 'scoped memory for tpu_custom_call.1']
    #allocation16 [shape = 'u8[16384]{0}', space=vmem, size = 0x4000, scoped, tag = 'output window, operand 0']
    #allocation17 [shape = 'u8[16384]{0}', space=vmem, size = 0x4000, scoped, tag = 'output window, operand 1']
    #allocation18 [shape = 's32[2]{0}', space=sflag, size = 0x8, scoped, tag = 'scoped memory for tpu_custom_call.1']
    %15 = vsyncpa [#allocation6], 0
    %s16 = scalar_lea.sflag [#allocation6], 1
    %17 = vsyncpa %s16, 0
    %18 = vsyncpa [#allocation9], 0
    %s19 = scalar_lea.sflag [#allocation9], 1
    %20 = vsyncpa %s19, 0
    %21 = vsyncpa [#allocation12], 0
    %22 = vsyncpa [#allocation15], 0
    %23 = vsyncpa [#allocation7], 0
    %s24 = scalar_lea.sflag [#allocation7], 1
    %25 = vsyncpa %s24, 0
    %26 = vsyncpa [#allocation18], 0
    %s27 = scalar_lea.sflag [#allocation18], 1
    %28 = vsyncpa %s27, 0
    loop: start=0, step=1, limit=4
    $region2: #{tpu_custom_call.1} parent=1 // loop_pre_header
      _
    $region3: #{tpu_custom_call.1} parent=1 // loop_header
      %s30 = sphi 0, %s34
      %p31 = scmp.ge.s32.totalorder %s30, 4
      %s37 = sphi 0, %s49
      %s38 = sphi 0, %s45
      %s39 = sphi 0, %s37
      %s40 = sphi 0, %s38
      %s41 = sphi 0, %s39
      %s42 = sphi 0, %s40
      %s54 = sphi 0, %s56
      %s57 = sphi 0, %s54
      %s58 = sphi 0, %s57
      %s74 = sphi 0, %s58
      %s80 = sphi 0, %s82
      %s83 = sphi 0, %s80
      %s84 = sphi 0, %s83
      %s100 = sphi 0, %s84
      %s104 = sphi 0, %s104
      %s106 = sphi 0, %s104
      %s107 = sphi 0, %s106
      %s121 = sphi 0, %s107
      %s125 = sphi 0, %s125
      %s127 = sphi 0, %s125
      %s128 = sphi 0, %s127
      %s142 = sphi 0, %s128
      %s146 = sphi 0, %s146
      %s148 = sphi 0, %s146
      %s149 = sphi 0, %s148
      %s163 = sphi 0, %s149
      %s167 = sphi 0, %s167
      %s169 = sphi 0, %s167
      %s170 = sphi 0, %s169
      %s184 = sphi 0, %s170
      %s188 = sphi 0, %s188
      %s190 = sphi 0, %s188
      %s191 = sphi 0, %s190
      %s205 = sphi 0, %s191
      %s209 = sphi 0, %s209
      %s211 = sphi 0, %s209
      %s212 = sphi 0, %s211
      %s226 = sphi 0, %s212
      %s234 = sphi 0, %s236
      %s237 = sphi 0, %s234
      %s238 = sphi 0, %s237
      %s254 = sphi 0, %s238
      %s262 = sphi 0, %s264
      %s265 = sphi 0, %s262
      %s266 = sphi 0, %s265
      %s282 = sphi 0, %s266
    $region4: #{tpu_custom_call.1} parent=1 // loop_header_branch
      %33 = sbr.rel (%p31) target = $region8
    $region5: #{tpu_custom_call.1} parent=1 // loop_body
      %s35 = ssub.s32 %s30, 1
      %s36 = ssub.s32 %s30, 2
      %s43 = sadd.s32 1, %s38
      %p44 = scmp.ge.s32.totalorder %s43, 1
      %s45 = scalar_select %p44, 0, %s43
      %s46 = sadd.s32 1, %s37
      %s47 = scalar_select %p44, %s46, %s37
      %p48 = scmp.ge.s32.totalorder %s47, 2
      %s49 = scalar_select %p48, 0, %s47
      %s50 = ssub.s32 %s37, %s49
      %s51 = ssub.s32 %s38, %s45
      %s52 = sor.u32 %s50, %s51
      %p53 = scmp.eq.s32.totalorder %s52, 0
      %s55 = sadd.s32 %s54, 1
      %s56 = scalar_select %p53, %s54, %s55
      %p59 = pneg %p53
      %p60 = scmp.eq.s32.totalorder %s30, 1
      %p61 = por %p59, %p60
      %p62 = scmp.ne.s32.totalorder %s54, %s57
      %p63 = scmp.eq.s32.totalorder %s30, 0
      %p64 = por %p62, %p63
      %p65 = scmp.ne.s32.totalorder %s54, %s57
      %p66 = scmp.eq.s32.totalorder %s35, 1
      %p67 = por %p65, %p66
      %p68 = scmp.ne.s32.totalorder %s57, %s58
      %p69 = scmp.eq.s32.totalorder %s35, 0
      %p70 = por %p68, %p69
      %p71 = scmp.ne.s32.totalorder %s57, %s58
      %p72 = scmp.eq.s32.totalorder %s36, 1
      %p73 = por %p71, %p72
      %p75 = scmp.ne.s32.totalorder %s58, %s74
      %p76 = scmp.eq.s32.totalorder %s36, 0
      %p77 = por %p75, %p76
      %s78 = ssub.s32 %s37, %s49
      %p79 = scmp.eq.s32.totalorder %s78, 0
      %s81 = sadd.s32 %s80, 1
      %s82 = scalar_select %p79, %s80, %s81
      %p85 = pneg %p79
      %p86 = scmp.eq.s32.totalorder %s30, 1
      %p87 = por %p85, %p86
      %p88 = scmp.ne.s32.totalorder %s80, %s83
      %p89 = scmp.eq.s32.totalorder %s30, 0
      %p90 = por %p88, %p89
      %p91 = scmp.ne.s32.totalorder %s80, %s83
      %p92 = scmp.eq.s32.totalorder %s35, 1
      %p93 = por %p91, %p92
      %p94 = scmp.ne.s32.totalorder %s83, %s84
      %p95 = scmp.eq.s32.totalorder %s35, 0
      %p96 = por %p94, %p95
      %p97 = scmp.ne.s32.totalorder %s83, %s84
      %p98 = scmp.eq.s32.totalorder %s36, 1
      %p99 = por %p97, %p98
      %p101 = scmp.ne.s32.totalorder %s84, %s100
      %p102 = scmp.eq.s32.totalorder %s36, 0
      %p103 = por %p101, %p102
      %s105 = sadd.s32 %s104, 1
      %p108 = scmp.eq.s32.totalorder %s30, 1
      %p109 = scmp.ne.s32.totalorder %s104, %s106
      %p110 = scmp.eq.s32.totalorder %s30, 0
      %p111 = por %p109, %p110
      %p112 = scmp.ne.s32.totalorder %s104, %s106
      %p113 = scmp.eq.s32.totalorder %s35, 1
      %p114 = por %p112, %p113
      %p115 = scmp.ne.s32.totalorder %s106, %s107
      %p116 = scmp.eq.s32.totalorder %s35, 0
      %p117 = por %p115, %p116
      %p118 = scmp.ne.s32.totalorder %s106, %s107
      %p119 = scmp.eq.s32.totalorder %s36, 1
      %p120 = por %p118, %p119
      %p122 = scmp.ne.s32.totalorder %s107, %s121
      %p123 = scmp.eq.s32.totalorder %s36, 0
      %p124 = por %p122, %p123
      %s126 = sadd.s32 %s125, 1
      %p129 = scmp.eq.s32.totalorder %s30, 1
      %p130 = scmp.ne.s32.totalorder %s125, %s127
      %p131 = scmp.eq.s32.totalorder %s30, 0
      %p132 = por %p130, %p131
      %p133 = scmp.ne.s32.totalorder %s125, %s127
      %p134 = scmp.eq.s32.totalorder %s35, 1
      %p135 = por %p133, %p134
      %p136 = scmp.ne.s32.totalorder %s127, %s128
      %p137 = scmp.eq.s32.totalorder %s35, 0
      %p138 = por %p136, %p137
      %p139 = scmp.ne.s32.totalorder %s127, %s128
      %p140 = scmp.eq.s32.totalorder %s36, 1
      %p141 = por %p139, %p140
      %p143 = scmp.ne.s32.totalorder %s128, %s142
      %p144 = scmp.eq.s32.totalorder %s36, 0
      %p145 = por %p143, %p144
      %s147 = sadd.s32 %s146, 1
      %p150 = scmp.eq.s32.totalorder %s30, 1
      %p151 = scmp.ne.s32.totalorder %s146, %s148
      %p152 = scmp.eq.s32.totalorder %s30, 0
      %p153 = por %p151, %p152
      %p154 = scmp.ne.s32.totalorder %s146, %s148
      %p155 = scmp.eq.s32.totalorder %s35, 1
      %p156 = por %p154, %p155
      %p157 = scmp.ne.s32.totalorder %s148, %s149
      %p158 = scmp.eq.s32.totalorder %s35, 0
      %p159 = por %p157, %p158
      %p160 = scmp.ne.s32.totalorder %s148, %s149
      %p161 = scmp.eq.s32.totalorder %s36, 1
      %p162 = por %p160, %p161
      %p164 = scmp.ne.s32.totalorder %s149, %s163
      %p165 = scmp.eq.s32.totalorder %s36, 0
      %p166 = por %p164, %p165
      %s168 = sadd.s32 %s167, 1
      %p171 = scmp.eq.s32.totalorder %s30, 1
      %p172 = scmp.ne.s32.totalorder %s167, %s169
      %p173 = scmp.eq.s32.totalorder %s30, 0
      %p174 = por %p172, %p173
      %p175 = scmp.ne.s32.totalorder %s167, %s169
      %p176 = scmp.eq.s32.totalorder %s35, 1
      %p177 = por %p175, %p176
      %p178 = scmp.ne.s32.totalorder %s169, %s170
      %p179 = scmp.eq.s32.totalorder %s35, 0
      %p180 = por %p178, %p179
      %p181 = scmp.ne.s32.totalorder %s169, %s170
      %p182 = scmp.eq.s32.totalorder %s36, 1
      %p183 = por %p181, %p182
      %p185 = scmp.ne.s32.totalorder %s170, %s184
      %p186 = scmp.eq.s32.totalorder %s36, 0
      %p187 = por %p185, %p186
      %s189 = sadd.s32 %s188, 1
      %p192 = scmp.eq.s32.totalorder %s30, 1
      %p193 = scmp.ne.s32.totalorder %s188, %s190
      %p194 = scmp.eq.s32.totalorder %s30, 0
      %p195 = por %p193, %p194
      %p196 = scmp.ne.s32.totalorder %s188, %s190
      %p197 = scmp.eq.s32.totalorder %s35, 1
      %p198 = por %p196, %p197
      %p199 = scmp.ne.s32.totalorder %s190, %s191
      %p200 = scmp.eq.s32.totalorder %s35, 0
      %p201 = por %p199, %p200
      %p202 = scmp.ne.s32.totalorder %s190, %s191
      %p203 = scmp.eq.s32.totalorder %s36, 1
      %p204 = por %p202, %p203
      %p206 = scmp.ne.s32.totalorder %s191, %s205
      %p207 = scmp.eq.s32.totalorder %s36, 0
      %p208 = por %p206, %p207
      %s210 = sadd.s32 %s209, 1
      %p213 = scmp.eq.s32.totalorder %s30, 1
      %p214 = scmp.ne.s32.totalorder %s209, %s211
      %p215 = scmp.eq.s32.totalorder %s30, 0
      %p216 = por %p214, %p215
      %p217 = scmp.ne.s32.totalorder %s209, %s211
      %p218 = scmp.eq.s32.totalorder %s35, 1
      %p219 = por %p217, %p218
      %p220 = scmp.ne.s32.totalorder %s211, %s212
      %p221 = scmp.eq.s32.totalorder %s35, 0
      %p222 = por %p220, %p221
      %p223 = scmp.ne.s32.totalorder %s211, %s212
      %p224 = scmp.eq.s32.totalorder %s36, 1
      %p225 = por %p223, %p224
      %p227 = scmp.ne.s32.totalorder %s212, %s226
      %p228 = scmp.eq.s32.totalorder %s36, 0
      %p229 = por %p227, %p228
      %s230 = ssub.s32 %s37, %s49
      %s231 = ssub.s32 %s38, %s45
      %s232 = sor.u32 %s230, %s231
      %p233 = scmp.eq.s32.totalorder %s232, 0
      %s235 = sadd.s32 %s234, 1
      %s236 = scalar_select %p233, %s234, %s235
      %p239 = pneg %p233
      %p240 = scmp.eq.s32.totalorder %s30, 1
      %p241 = por %p239, %p240
      %p242 = scmp.ne.s32.totalorder %s234, %s237
      %p243 = scmp.eq.s32.totalorder %s30, 0
      %p244 = por %p242, %p243
      %p245 = scmp.ne.s32.totalorder %s234, %s237
      %p246 = scmp.eq.s32.totalorder %s35, 1
      %p247 = por %p245, %p246
      %p248 = scmp.ne.s32.totalorder %s237, %s238
      %p249 = scmp.eq.s32.totalorder %s35, 0
      %p250 = por %p248, %p249
      %p251 = scmp.ne.s32.totalorder %s237, %s238
      %p252 = scmp.eq.s32.totalorder %s36, 1
      %p253 = por %p251, %p252
      %p255 = scmp.ne.s32.totalorder %s238, %s254
      %p256 = scmp.eq.s32.totalorder %s36, 0
      %p257 = por %p255, %p256
      %s258 = ssub.s32 %s37, %s49
      %s259 = ssub.s32 %s38, %s45
      %s260 = sor.u32 %s258, %s259
      %p261 = scmp.eq.s32.totalorder %s260, 0
      %s263 = sadd.s32 %s262, 1
      %s264 = scalar_select %p261, %s262, %s263
      %p267 = pneg %p261
      %p268 = scmp.eq.s32.totalorder %s30, 1
      %p269 = por %p267, %p268
      %p270 = scmp.ne.s32.totalorder %s262, %s265
      %p271 = scmp.eq.s32.totalorder %s30, 0
      %p272 = por %p270, %p271
      %p273 = scmp.ne.s32.totalorder %s262, %s265
      %p274 = scmp.eq.s32.totalorder %s35, 1
      %p275 = por %p273, %p274
      %p276 = scmp.ne.s32.totalorder %s265, %s266
      %p277 = scmp.eq.s32.totalorder %s35, 0
      %p278 = por %p276, %p277
      %p279 = scmp.ne.s32.totalorder %s265, %s266
      %p280 = scmp.eq.s32.totalorder %s36, 1
      %p281 = por %p279, %p280
      %p283 = scmp.ne.s32.totalorder %s266, %s282
      %p284 = scmp.eq.s32.totalorder %s36, 0
      %p285 = por %p283, %p284
      %p286 = scmp.le.s32.totalorder 1, %s30
      %p287 = scmp.lt.s32.totalorder %s30, 3
      %p288 = pnand %p286, %p287
      %p289 = pneg %p288
      // Predicated region
      $region9: #{tpu_custom_call.1} parent=5 // pred_check
        _
      $region10: #{tpu_custom_call.1} parent=5 // pred_check_branch
        %291 = sbr.rel (%p288) target = $region12
      $region11: #{tpu_custom_call.1} parent=5 // pred_region
        %s292 = ssub.s32 %s30, 1
        // Predicated region
        $region13: #{tpu_custom_call.1} parent=11 // pred_check
          %p293 = pneg %p117
        $region14: #{tpu_custom_call.1} parent=11 // pred_check_branch
          %295 = sbr.rel (%p293) target = $region16
        $region15: #{tpu_custom_call.1} parent=11 // pred_region
          %s297 = ssub.s32 1024, 1024
          %298 = vsyncadd [#allocation9], %s297
          %s299 = sshll.u32 [#allocation10], 4
          %s300 = int_to_ptr.vmem [resolvable:$true] %s299
          %305 = dma.hbm_to_vmem [thread:$0]  %s2, 1024, %s300, [#allocation9], 64, 64, 4
        $region16: #{tpu_custom_call.1} parent=11 // pred_fallthru
          _
        // Predicated region
        $region17: #{tpu_custom_call.1} parent=11 // pred_check
          %p306 = pneg %p138
        $region18: #{tpu_custom_call.1} parent=11 // pred_check_branch
          %308 = sbr.rel (%p306) target = $region20
        $region19: #{tpu_custom_call.1} parent=11 // pred_region
          %s310 = ssub.s32 2048, 2048
          %311 = vsyncadd [#allocation12], %s310
          %s312 = sshll.u32 [#allocation11], 4
          %s313 = int_to_ptr.vmem [resolvable:$true] %s312
          %318 = dma.hbm_to_vmem [thread:$0]  %s3, 2048, %s313, [#allocation12], 128, 128, 8
        $region20: #{tpu_custom_call.1} parent=11 // pred_fallthru
          _
        // Predicated region
        $region21: #{tpu_custom_call.1} parent=11 // pred_check
          %p319 = pneg %p159
        $region22: #{tpu_custom_call.1} parent=11 // pred_check_branch
          %321 = sbr.rel (%p319) target = $region24
        $region23: #{tpu_custom_call.1} parent=11 // pred_region
          %s323 = ssub.s32 1024, 1024
          %324 = vsyncadd [#allocation12], %s323
          %s325 = sshll.u32 [#allocation13], 4
          %s326 = int_to_ptr.vmem [resolvable:$true] %s325
          %331 = dma.hbm_to_vmem [thread:$0]  %s4, 1024, %s326, [#allocation12], 64, 64, 4
        $region24: #{tpu_custom_call.1} parent=11 // pred_fallthru
          _
        // Predicated region
        $region25: #{tpu_custom_call.1} parent=11 // pred_check
          %p332 = pneg %p180
        $region26: #{tpu_custom_call.1} parent=11 // pred_check_branch
          %334 = sbr.rel (%p332) target = $region28
        $region27: #{tpu_custom_call.1} parent=11 // pred_region
          %s336 = ssub.s32 1024, 1024
          %337 = vsyncadd [#allocation15], %s336
          %s338 = sshll.u32 [#allocation14], 4
          %s339 = int_to_ptr.vmem [resolvable:$true] %s338
          %344 = dma.hbm_to_vmem [thread:$0]  %s5, 1024, %s339, [#allocation15], 64, 64, 4
        $region28: #{tpu_custom_call.1} parent=11 // pred_fallthru
          _
        // Predicated region
        $region29: #{tpu_custom_call.1} parent=11 // pred_check
          %p345 = pneg %p201
        $region30: #{tpu_custom_call.1} parent=11 // pred_check_branch
          %347 = sbr.rel (%p345) target = $region32
        $region31: #{tpu_custom_call.1} parent=11 // pred_region
          _
        $region32: #{tpu_custom_call.1} parent=11 // pred_fallthru
          _
        // Predicated region
        $region33: #{tpu_custom_call.1} parent=11 // pred_check
          %p348 = pneg %p222
        $region34: #{tpu_custom_call.1} parent=11 // pred_check_branch
          %350 = sbr.rel (%p348) target = $region36
        $region35: #{tpu_custom_call.1} parent=11 // pred_region
          _
        $region36: #{tpu_custom_call.1} parent=11 // pred_fallthru
          _
      $region12: #{tpu_custom_call.1} parent=5 // pred_fallthru
        _
      %p351 = scmp.lt.s32.totalorder %s30, 2
      // Predicated region
      $region37: #{tpu_custom_call.1} parent=5 // pred_check
        %p352 = pneg %p351
      $region38: #{tpu_custom_call.1} parent=5 // pred_check_branch
        %354 = sbr.rel (%p352) target = $region40
      $region39: #{tpu_custom_call.1} parent=5 // pred_region
        // Predicated region
        $region41: #{tpu_custom_call.1} parent=39 // pred_check
          %p355 = pneg %p64
        $region42: #{tpu_custom_call.1} parent=39 // pred_check_branch
          %357 = sbr.rel (%p355) target = $region44
        $region43: #{tpu_custom_call.1} parent=39 // pred_region
          %s358 = sand.u32 %s54, 1
          %s359 = scalar_lea.sflag [#allocation6], %s358
          %s360 = sand.u32 %s54, 1
          %s361 = smul.addr %s360, 16
          %s362 = scalar_lea.vmem [#allocation5], %s361
          %s363 = smul.u32 2, %s38
          %s365 = ssub.s32 256, 256
          %366 = vsyncadd %s359, %s365
          %s367 = smul.addr %s37, 2
          %s368 = sadd.s32 %s363, %s367
          %s369 = smul.addr %s368, 128
          %s370 = scalar_lea.hbm %s0, %s369
          %s371 = sshll.u32 %s362, 4
          %s372 = int_to_ptr.vmem [resolvable:$true] %s371
          %377 = dma.hbm_to_vmem [thread:$0]  %s370, 256, %s372, %s359, 128, 128, 8
        $region44: #{tpu_custom_call.1} parent=39 // pred_fallthru
          _
        // Predicated region
        $region45: #{tpu_custom_call.1} parent=39 // pred_check
          %p378 = pneg %p90
        $region46: #{tpu_custom_call.1} parent=39 // pred_check_branch
          %380 = sbr.rel (%p378) target = $region48
        $region47: #{tpu_custom_call.1} parent=39 // pred_region
          %s381 = sand.u32 %s30, 1
          %s382 = scalar_lea.sflag [#allocation9], %s381
          %s383 = sand.u32 %s80, 1
          %s384 = smul.addr %s383, 16
          %s385 = scalar_lea.vmem [#allocation8], %s384
          %s387 = ssub.s32 256, 256
          %388 = vsyncadd %s382, %s387
          %s389 = smul.addr %s37, 2
          %s390 = smul.addr %s389, 128
          %s391 = scalar_lea.hbm %s1, %s390
          %s392 = sshll.u32 %s385, 4
          %s393 = int_to_ptr.vmem [resolvable:$true] %s392
          %398 = dma.hbm_to_vmem [thread:$0]  %s391, 256, %s393, %s382, 128, 128, 8
        $region48: #{tpu_custom_call.1} parent=39 // pred_fallthru
          _
      $region40: #{tpu_custom_call.1} parent=5 // pred_fallthru
        _
      %p399 = scmp.le.s32.totalorder 1, %s30
      %p400 = scmp.lt.s32.totalorder %s30, 3
      %p401 = pnand %p399, %p400
      %p402 = pneg %p401
      // Predicated region
      $region49: #{tpu_custom_call.1} parent=5 // pred_check
        _
      $region50: #{tpu_custom_call.1} parent=5 // pred_check_branch
        %404 = sbr.rel (%p401) target = $region52
      $region51: #{tpu_custom_call.1} parent=5 // pred_region
        %s405 = ssub.s32 %s30, 1
        %s406 = sand.u32 %s57, 1
        %s407 = scalar_lea.sflag [#allocation6], %s406
        %s408 = sand.u32 %s57, 1
        %s409 = smul.addr %s408, 16
        %s410 = scalar_lea.vmem [#allocation5], %s409
        // Predicated region
        $region53: #{tpu_custom_call.1} parent=51 // pred_check
          %p411 = pneg %p70
        $region54: #{tpu_custom_call.1} parent=51 // pred_check_branch
          %413 = sbr.rel (%p411) target = $region56
        $region55: #{tpu_custom_call.1} parent=51 // pred_region
          %414 = dma.done %s407, 256
        $region56: #{tpu_custom_call.1} parent=51 // pred_fallthru
          _
        %s415 = sand.u32 %s35, 1
        %s416 = scalar_lea.sflag [#allocation9], %s415
        %s417 = sand.u32 %s83, 1
        %s418 = smul.addr %s417, 16
        %s419 = scalar_lea.vmem [#allocation8], %s418
        // Predicated region
        $region57: #{tpu_custom_call.1} parent=51 // pred_check
          %p420 = pneg %p96
        $region58: #{tpu_custom_call.1} parent=51 // pred_check_branch
          %422 = sbr.rel (%p420) target = $region60
        $region59: #{tpu_custom_call.1} parent=51 // pred_region
          %423 = dma.done %s416, 256
        $region60: #{tpu_custom_call.1} parent=51 // pred_fallthru
          _
        // Predicated region
        $region61: #{tpu_custom_call.1} parent=51 // pred_check
          %p424 = pneg %p117
        $region62: #{tpu_custom_call.1} parent=51 // pred_check_branch
          %426 = sbr.rel (%p424) target = $region64
        $region63: #{tpu_custom_call.1} parent=51 // pred_region
          %427 = dma.done [#allocation9], 1024
        $region64: #{tpu_custom_call.1} parent=51 // pred_fallthru
          _
        // Predicated region
        $region65: #{tpu_custom_call.1} parent=51 // pred_check
          %p428 = pneg %p138
        $region66: #{tpu_custom_call.1} parent=51 // pred_check_branch
          %430 = sbr.rel (%p428) target = $region68
        $region67: #{tpu_custom_call.1} parent=51 // pred_region
          %431 = dma.done [#allocation12], 2048
        $region68: #{tpu_custom_call.1} parent=51 // pred_fallthru
          _
        // Predicated region
        $region69: #{tpu_custom_call.1} parent=51 // pred_check
          %p432 = pneg %p159
        $region70: #{tpu_custom_call.1} parent=51 // pred_check_branch
          %434 = sbr.rel (%p432) target = $region72
        $region71: #{tpu_custom_call.1} parent=51 // pred_region
          %435 = dma.done [#allocation12], 1024
        $region72: #{tpu_custom_call.1} parent=51 // pred_fallthru
          _
        // Predicated region
        $region73: #{tpu_custom_call.1} parent=51 // pred_check
          %p436 = pneg %p180
        $region74: #{tpu_custom_call.1} parent=51 // pred_check_branch
          %438 = sbr.rel (%p436) target = $region76
        $region75: #{tpu_custom_call.1} parent=51 // pred_region
          %439 = dma.done [#allocation15], 1024
        $region76: #{tpu_custom_call.1} parent=51 // pred_fallthru
          _
        %s440 = sand.u32 %s57, 1
        %s441 = scalar_lea.sflag [#allocation6], %s440
        %s442 = sand.u32 %s57, 1
        %s443 = smul.addr %s442, 16
        %s444 = scalar_lea.vmem [#allocation5], %s443
        %p445 = pneg %p70
        %p446 = pneg %p67
        %s447 = sand.u32 %s35, 1
        %s448 = scalar_lea.sflag [#allocation9], %s447
        %s449 = sand.u32 %s83, 1
        %s450 = smul.addr %s449, 16
        %s451 = scalar_lea.vmem [#allocation8], %s450
        %p452 = pneg %p96
        %p453 = pneg %p93
        %p454 = pneg %p117
        %p455 = pneg %p114
        %p456 = pneg %p138
        %p457 = pneg %p135
        %p458 = pneg %p159
        %p459 = pneg %p156
        %p460 = pneg %p180
        %p461 = pneg %p177
        %p462 = pneg %p201
        %p463 = pneg %p198
        %p464 = pneg %p222
        %p465 = pneg %p219
        %p466 = pneg %p250
        %p467 = pneg %p247
        %s468 = sand.u32 %s237, 1
        %s469 = scalar_lea.sflag [#allocation7], %s468
        %s470 = sand.u32 %s237, 1
        %s471 = smul.addr %s470, 16
        %s472 = scalar_lea.vmem [#allocation16], %s471
        %p473 = pneg %p278
        %p474 = pneg %p275
        %s475 = sand.u32 %s265, 1
        %s476 = scalar_lea.sflag [#allocation18], %s475
        %s477 = sand.u32 %s265, 1
        %s478 = smul.addr %s477, 16
        %s479 = scalar_lea.vmem [#allocation17], %s478
        %s480 = smul.u32 2, %s40
        %s481 = smul.u32 2, %s40
        %s482 = smul.u32 2, %s40
        %p484 = scmp.eq.s32.totalorder %s40, 0
        // Predicated region
        $region77: #{tpu_custom_call.1} parent=51 // pred_check
          %p485 = pneg %p484
        $region78: #{tpu_custom_call.1} parent=51 // pred_check_branch
          %487 = sbr.rel (%p485) target = $region80
        $region79: #{tpu_custom_call.1} parent=51 // pred_region
          %v488 = vld [vmem:[%s419] sm:$0xff]
          %v489 = vld [vmem:[%s419 + $0x8] sm:$0xff]
          %v490 = vpack.c.bf16 %v489, %v488
          %v491 = vld [vmem:[#allocation11] sm:$0xff]
          %v492 = vld [vmem:[#allocation11 + $0x8] sm:$0xff]
          %v493 = vld [vmem:[#allocation11 + $0x10] sm:$0xff]
          %v494 = vld [vmem:[#allocation11 + $0x18] sm:$0xff]
          %v495 = vld [vmem:[#allocation11 + $0x20] sm:$0xff]
          %v496 = vld [vmem:[#allocation11 + $0x28] sm:$0xff]
          %v497 = vld [vmem:[#allocation11 + $0x30] sm:$0xff]
          %v498 = vld [vmem:[#allocation11 + $0x38] sm:$0xff]
          %v499 = vld [vmem:[#allocation11 + $0x40] sm:$0xff]
          %v500 = vld [vmem:[#allocation11 + $0x48] sm:$0xff]
          %v501 = vld [vmem:[#allocation11 + $0x50] sm:$0xff]
          %v502 = vld [vmem:[#allocation11 + $0x58] sm:$0xff]
          %v503 = vld [vmem:[#allocation11 + $0x60] sm:$0xff]
          %v504 = vld [vmem:[#allocation11 + $0x68] sm:$0xff]
          %v505 = vld [vmem:[#allocation11 + $0x70] sm:$0xff]
          %v506 = vld [vmem:[#allocation11 + $0x78] sm:$0xff]
          %v523 = vunpack.c.l.b16 %v491
          %v524 = vunpack.c.h.b16 %v491
          %v525 = vunpack.c.l.b16 %v492
          %v526 = vunpack.c.h.b16 %v492
          %v527 = vunpack.c.l.b16 %v493
          %v528 = vunpack.c.h.b16 %v493
          %v529 = vunpack.c.l.b16 %v494
          %v530 = vunpack.c.h.b16 %v494
          %v531 = vunpack.c.l.b16 %v495
          %v532 = vunpack.c.h.b16 %v495
          %v533 = vunpack.c.l.b16 %v496
          %v534 = vunpack.c.h.b16 %v496
          %v535 = vunpack.c.l.b16 %v497
          %v536 = vunpack.c.h.b16 %v497
          %v537 = vunpack.c.l.b16 %v498
          %v538 = vunpack.c.h.b16 %v498
          %v539 = vunpack.c.l.b16 %v499
          %v540 = vunpack.c.h.b16 %v499
          %v541 = vunpack.c.l.b16 %v500
          %v542 = vunpack.c.h.b16 %v500
          %v543 = vunpack.c.l.b16 %v501
          %v544 = vunpack.c.h.b16 %v501
          %v545 = vunpack.c.l.b16 %v502
          %v546 = vunpack.c.h.b16 %v502
          %v547 = vunpack.c.l.b16 %v503
          %v548 = vunpack.c.h.b16 %v503
          %v549 = vunpack.c.l.b16 %v504
          %v550 = vunpack.c.h.b16 %v504
          %v551 = vunpack.c.l.b16 %v505
          %v552 = vunpack.c.h.b16 %v505
          %v553 = vunpack.c.l.b16 %v506
          %v554 = vunpack.c.h.b16 %v506
          %v555 = vpack.c.b16 %v525, %v523
          %v556 = vpack.c.b16 %v526, %v524
          %v557 = vpack.c.b16 %v529, %v527
          %v558 = vpack.c.b16 %v530, %v528
          %v559 = vpack.c.b16 %v533, %v531
          %v560 = vpack.c.b16 %v534, %v532
          %v561 = vpack.c.b16 %v537, %v535
          %v562 = vpack.c.b16 %v538, %v536
          %v563 = vpack.c.b16 %v541, %v539
          %v564 = vpack.c.b16 %v542, %v540
          %v565 = vpack.c.b16 %v545, %v543
          %v566 = vpack.c.b16 %v546, %v544
          %v567 = vpack.c.b16 %v549, %v547
          %v568 = vpack.c.b16 %v550, %v548
          %v569 = vpack.c.b16 %v553, %v551
          %v570 = vpack.c.b16 %v554, %v552
          %587 = vmatprep.subr.bf16.mxu0 %v570
          %588 = vmatpush1.bf16.msra.mxu0 %v569
          %589 = vmatprep.subr.bf16.mxu0 %v568
          %590 = vmatpush1.bf16.msra.mxu0 %v567
          %591 = vmatprep.subr.bf16.mxu0 %v566
          %592 = vmatpush1.bf16.msra.mxu0 %v565
          %593 = vmatprep.subr.bf16.mxu0 %v564
          %594 = vmatpush1.bf16.msra.mxu0 %v563
          %595 = vmatprep.subr.bf16.mxu0 %v562
          %596 = vmatpush1.bf16.msra.mxu0 %v561
          %597 = vmatprep.subr.bf16.mxu0 %v560
          %598 = vmatpush1.bf16.msra.mxu0 %v559
          %599 = vmatprep.subr.bf16.mxu0 %v558
          %600 = vmatpush1.bf16.msra.mxu0 %v557
          %601 = vmatprep.subr.bf16.mxu0 %v556
          %602 = vmatpush1.bf16.msra.mxu0 %v555
          %603 = vmatprep.subr.bf16.mxu0 0
          %604 = vmatpush2.bf16.msra.mxu0 0
          %605 = vmatprep.subr.bf16.mxu0 0
          %606 = vmatpush2.bf16.msra.mxu0 0
          %607 = vmatprep.subr.bf16.mxu0 0
          %608 = vmatpush2.bf16.msra.mxu0 0
          %609 = vmatprep.subr.bf16.mxu0 0
          %610 = vmatpush2.bf16.msra.mxu0 0
          %611 = vmatprep.subr.bf16.mxu0 0
          %612 = vmatpush2.bf16.msra.mxu0 0
          %613 = vmatprep.subr.bf16.mxu0 0
          %614 = vmatpush2.bf16.msra.mxu0 0
          %615 = vmatprep.subr.bf16.mxu0 0
          %616 = vmatpush2.bf16.msra.mxu0 0
          %617 = vmatprep.subr.bf16.mxu0 0
          %618 = vmatpush2.bf16.msra.mxu0 0
          %619 = vmatprep.mubr.bf16.mxu0 0
          %620 = vmatmul.mubr.bf16.gmra.mxu0 %v490
          %v621 = vpop.f32.mrf.mxu0
          %v622 = vadd.f32 0.0, %v621
          %v623 = vpop.f32.mrf.mxu0
          %v624 = vadd.f32 0.0, %v623
          %v625 = vpop.f32.mrf.mxu0
          %v626 = vadd.f32 0.0, %v625
          %v627 = vpop.f32.mrf.mxu0
          %v628 = vadd.f32 0.0, %v627
          %629 = vdwg.mxu0
          %v630 = vpack.c.bf16 %v626, %v622
          %v632 = vunpack.c.l.b16 %v630
          %v633 = vunpack.c.h.b16 %v630
          %v634 = vpack.c.b16 %v632, %v632
          %v635 = vpack.c.b16 %v633, %v633
          %638 = vst [vmem:[#allocation2] sm:$0xf] %v634
          %639 = vst [vmem:[#allocation2 + $0x4] sm:$0xf] %v635
          %v640 = vpack.c.bf16 %v628, %v624
          %v642 = vunpack.c.l.b16 %v640
          %v643 = vunpack.c.h.b16 %v640
          %v644 = vpack.c.b16 %v642, %v642
          %v645 = vpack.c.b16 %v643, %v643
          %648 = vst [vmem:[#allocation3] sm:$0xf] %v644
          %649 = vst [vmem:[#allocation3 + $0x4] sm:$0xf] %v645
        $region80: #{tpu_custom_call.1} parent=51 // pred_fallthru
          _
        %v650 = vld [vmem:[%s410] sm:$0xff]
        %v651 = vld [vmem:[%s410 + $0x8] sm:$0xff]
        %v652 = vpack.c.bf16 %v651, %v650
        %v653 = vld [vmem:[#allocation10] sm:$0xf]
        %v654 = vld [vmem:[#allocation10 + $0x4] sm:$0xf]
        %v655 = vld [vmem:[#allocation10 + $0x8] sm:$0xf]
        %v656 = vld [vmem:[#allocation10 + $0xc] sm:$0xf]
        %v657 = vld [vmem:[#allocation10 + $0x10] sm:$0xf]
        %v658 = vld [vmem:[#allocation10 + $0x14] sm:$0xf]
        %v659 = vld [vmem:[#allocation10 + $0x18] sm:$0xf]
        %v660 = vld [vmem:[#allocation10 + $0x1c] sm:$0xf]
        %v661 = vld [vmem:[#allocation10 + $0x20] sm:$0xf]
        %v662 = vld [vmem:[#allocation10 + $0x24] sm:$0xf]
        %v663 = vld [vmem:[#allocation10 + $0x28] sm:$0xf]
        %v664 = vld [vmem:[#allocation10 + $0x2c] sm:$0xf]
        %v665 = vld [vmem:[#allocation10 + $0x30] sm:$0xf]
        %v666 = vld [vmem:[#allocation10 + $0x34] sm:$0xf]
        %v667 = vld [vmem:[#allocation10 + $0x38] sm:$0xf]
        %v668 = vld [vmem:[#allocation10 + $0x3c] sm:$0xf]
        %v685 = vunpack.c.l.b16 %v653
        %v686 = vunpack.c.l.b16 %v654
        %v687 = vunpack.c.l.b16 %v655
        %v688 = vunpack.c.l.b16 %v656
        %v689 = vunpack.c.l.b16 %v657
        %v690 = vunpack.c.l.b16 %v658
        %v691 = vunpack.c.l.b16 %v659
        %v692 = vunpack.c.l.b16 %v660
        %v693 = vunpack.c.l.b16 %v661
        %v694 = vunpack.c.l.b16 %v662
        %v695 = vunpack.c.l.b16 %v663
        %v696 = vunpack.c.l.b16 %v664
        %v697 = vunpack.c.l.b16 %v665
        %v698 = vunpack.c.l.b16 %v666
        %v699 = vunpack.c.l.b16 %v667
        %v700 = vunpack.c.l.b16 %v668
        %v701 = vpack.c.b16 %v686, %v685
        %v702 = vpack.c.b16 %v688, %v687
        %v703 = vpack.c.b16 %v690, %v689
        %v704 = vpack.c.b16 %v692, %v691
        %v705 = vpack.c.b16 %v694, %v693
        %v706 = vpack.c.b16 %v696, %v695
        %v707 = vpack.c.b16 %v698, %v697
        %v708 = vpack.c.b16 %v700, %v699
        %717 = vmatprep.subr.bf16.mxu0 0
        %718 = vmatpush1.bf16.msra.mxu0 %v708
        %719 = vmatprep.subr.bf16.mxu0 0
        %720 = vmatpush1.bf16.msra.mxu0 %v707
        %721 = vmatprep.subr.bf16.mxu0 0
        %722 = vmatpush1.bf16.msra.mxu0 %v706
        %723 = vmatprep.subr.bf16.mxu0 0
        %724 = vmatpush1.bf16.msra.mxu0 %v705
        %725 = vmatprep.subr.bf16.mxu0 0
        %726 = vmatpush1.bf16.msra.mxu0 %v704
        %727 = vmatprep.subr.bf16.mxu0 0
        %728 = vmatpush1.bf16.msra.mxu0 %v703
        %729 = vmatprep.subr.bf16.mxu0 0
        %730 = vmatpush1.bf16.msra.mxu0 %v702
        %731 = vmatprep.subr.bf16.mxu0 0
        %732 = vmatpush1.bf16.msra.mxu0 %v701
        %733 = vmatprep.subr.bf16.mxu0 0
        %734 = vmatpush2.bf16.msra.mxu0 0
        %735 = vmatprep.subr.bf16.mxu0 0
        %736 = vmatpush2.bf16.msra.mxu0 0
        %737 = vmatprep.subr.bf16.mxu0 0
        %738 = vmatpush2.bf16.msra.mxu0 0
        %739 = vmatprep.subr.bf16.mxu0 0
        %740 = vmatpush2.bf16.msra.mxu0 0
        %741 = vmatprep.subr.bf16.mxu0 0
        %742 = vmatpush2.bf16.msra.mxu0 0
        %743 = vmatprep.subr.bf16.mxu0 0
        %744 = vmatpush2.bf16.msra.mxu0 0
        %745 = vmatprep.subr.bf16.mxu0 0
        %746 = vmatpush2.bf16.msra.mxu0 0
        %747 = vmatprep.subr.bf16.mxu0 0
        %748 = vmatpush2.bf16.msra.mxu0 0
        %749 = vmatprep.mubr.bf16.mxu0 0
        %750 = vmatmul.mubr.bf16.gmra.mxu0 %v652
        %v751 = vpop.f32.mrf.mxu0
        %v752 = vadd.f32 0.0, %v751
        %v753 = vpop.f32.mrf.mxu0
        %v754 = vpop.f32.mrf.mxu0
        %v755 = vadd.f32 0.0, %v754
        %v756 = vpop.f32.mrf.mxu0
        %757 = vdwg.mxu0
        %v758 = vpack.c.bf16 %v755, %v752
        %v759 = vld [vmem:[#allocation2] sm:$0xf]
        %v760 = vld [vmem:[#allocation2 + $0x4] sm:$0xf]
        %v761 = vld [vmem:[#allocation3] sm:$0xf]
        %v762 = vld [vmem:[#allocation3 + $0x4] sm:$0xf]
        %v765 = vunpack.c.l.b16 %v759
        %v766 = vunpack.c.l.b16 %v760
        %v767 = vpack.c.b16 %v766, %v765
        %vm768 = vcmask 130048
        %v770 = vsel %vm768, %v758, 0
        %v773 = vsel %vm768, %v767, 0
        %775 = vmatprep.subr.bf16.mxu0 0
        %776 = vmatpush1.bf16.xpose.msra.mxu0 0
        %777 = vmatprep.subr.bf16.mxu0 0
        %778 = vmatpush1.bf16.xpose.msra.mxu0 0
        %779 = vmatprep.subr.bf16.mxu0 0
        %780 = vmatpush1.bf16.xpose.msra.mxu0 0
        %781 = vmatprep.subr.bf16.mxu0 0
        %782 = vmatpush1.bf16.xpose.msra.mxu0 0
        %783 = vmatprep.subr.bf16.mxu0 0
        %784 = vmatpush1.bf16.xpose.msra.mxu0 0
        %785 = vmatprep.subr.bf16.mxu0 0
        %786 = vmatpush1.bf16.xpose.msra.mxu0 0
        %787 = vmatprep.subr.bf16.mxu0 0
        %788 = vmatpush1.bf16.xpose.msra.mxu0 0
        %789 = vmatprep.subr.bf16.mxu0 0
        %790 = vmatpush1.bf16.xpose.msra.mxu0 %v773
        %791 = vmatprep.subr.bf16.mxu0 0
        %792 = vmatpush2.bf16.xpose.msra.mxu0 0
        %793 = vmatprep.subr.bf16.mxu0 0
        %794 = vmatpush2.bf16.xpose.msra.mxu0 0
        %795 = vmatprep.subr.bf16.mxu0 0
        %796 = vmatpush2.bf16.xpose.msra.mxu0 0
        %797 = vmatprep.subr.bf16.mxu0 0
        %798 = vmatpush2.bf16.xpose.msra.mxu0 0
        %799 = vmatprep.subr.bf16.mxu0 0
        %800 = vmatpush2.bf16.xpose.msra.mxu0 0
        %801 = vmatprep.subr.bf16.mxu0 0
        %802 = vmatpush2.bf16.xpose.msra.mxu0 0
        %803 = vmatprep.subr.bf16.mxu0 0
        %804 = vmatpush2.bf16.xpose.msra.mxu0 0
        %805 = vmatprep.subr.bf16.mxu0 0
        %806 = vmatpush2.bf16.xpose.msra.mxu0 0
        %807 = vmatprep.mubr.bf16.mxu0 0
        %808 = vmatmul.mubr.bf16.gmra.mxu0 %v770
        %v809 = vpop.f32.mrf.mxu0
        %v810 = vadd.f32 0.0, %v809
        %v811 = vpop.f32.mrf.mxu0
        %v812 = vpop.f32.mrf.mxu0
        %v813 = vadd.f32 0.0, %v812
        %v814 = vpop.f32.mrf.mxu0
        %815 = vdwg.mxu0
        %v816 = vsel %vm768, %v810, -inf
        %817 = vmax.xlane.f32.xlu0 %v816
        %v818 = vpop.xlane.xlu0 %817
        %v819 = vsel %vm768, %v813, -inf
        %820 = vmax.xlane.f32.xlu0 %v819
        %v821 = vpop.xlane.xlu0 %820
        %v822 = vsub.f32 %v810, %v818
        %v823 = vsub.f32 %v813, %v821
        %v824 = vmul.f32 %v822, 1.442695
        %v825 = vpow.pop %v824
        %v826 = vmul.f32 %v823, 1.442695
        %v827 = vpow.pop %v826
        %v828 = vsel %vm768, %v825, 0.0
        %829 = vadd.xlane.f32.xlu0 %v828
        %v830 = vpop.xlane.xlu0 %829
        %v831 = vsel %vm768, %v827, 0.0
        %832 = vadd.xlane.f32.xlu0 %v831
        %v833 = vpop.xlane.xlu0 %832
        %v834 = vrcp.pop %v830
        %v835 = vrcp.pop %v833
        %v836 = vmul.f32 %v825, %v834
        %v837 = vmul.f32 %v827, %v835
        %v838 = vpack.c.bf16 %v837, %v836
        %v841 = vunpack.c.l.b16 %v761
        %v842 = vunpack.c.l.b16 %v762
        %v843 = vpack.c.b16 %v842, %v841
        %v846 = vsel %vm768, %v838, 0
        %848 = vmatprep.subr.bf16.mxu0 0
        %849 = vmatpush1.bf16.msra.mxu0 0
        %850 = vmatprep.subr.bf16.mxu0 0
        %851 = vmatpush1.bf16.msra.mxu0 0
        %852 = vmatprep.subr.bf16.mxu0 0
        %853 = vmatpush1.bf16.msra.mxu0 0
        %854 = vmatprep.subr.bf16.mxu0 0
        %855 = vmatpush1.bf16.msra.mxu0 0
        %856 = vmatprep.subr.bf16.mxu0 0
        %857 = vmatpush1.bf16.msra.mxu0 0
        %858 = vmatprep.subr.bf16.mxu0 0
        %859 = vmatpush1.bf16.msra.mxu0 0
        %860 = vmatprep.subr.bf16.mxu0 0
        %861 = vmatpush1.bf16.msra.mxu0 0
        %862 = vmatprep.subr.bf16.mxu0 0
        %863 = vmatpush1.bf16.msra.mxu0 %v843
        %864 = vmatprep.subr.bf16.mxu0 0
        %865 = vmatpush2.bf16.msra.mxu0 0
        %866 = vmatprep.subr.bf16.mxu0 0
        %867 = vmatpush2.bf16.msra.mxu0 0
        %868 = vmatprep.subr.bf16.mxu0 0
        %869 = vmatpush2.bf16.msra.mxu0 0
        %870 = vmatprep.subr.bf16.mxu0 0
        %871 = vmatpush2.bf16.msra.mxu0 0
        %872 = vmatprep.subr.bf16.mxu0 0
        %873 = vmatpush2.bf16.msra.mxu0 0
        %874 = vmatprep.subr.bf16.mxu0 0
        %875 = vmatpush2.bf16.msra.mxu0 0
        %876 = vmatprep.subr.bf16.mxu0 0
        %877 = vmatpush2.bf16.msra.mxu0 0
        %878 = vmatprep.subr.bf16.mxu0 0
        %879 = vmatpush2.bf16.msra.mxu0 0
        %880 = vmatprep.mubr.bf16.mxu0 0
        %881 = vmatmul.mubr.bf16.gmra.mxu0 %v846
        %v882 = vpop.f32.mrf.mxu0
        %v883 = vadd.f32 0.0, %v882
        %v884 = vpop.f32.mrf.mxu0
        %v885 = vpop.f32.mrf.mxu0
        %v886 = vadd.f32 0.0, %v885
        %v887 = vpop.f32.mrf.mxu0
        %888 = vdwg.mxu0
        %889 = vst.msk [vmem:[#allocation4] sm:$0xff] %vm768, %v883
        %890 = vst.msk [vmem:[#allocation4 + $0x8] sm:$0xff] %vm768, %v886
        %892 = vrot.lane.b32.xlu0 %v758, 112
        %v893 = vpop.permute.xlu0 %892
        %894 = vrot.lane.b32.xlu0 %v767, 112
        %v895 = vpop.permute.xlu0 %894
        %v897 = vsel %vm768, %v893, 0
        %v900 = vsel %vm768, %v895, 0
        %902 = vmatprep.subr.bf16.mxu0 0
        %903 = vmatpush1.bf16.xpose.msra.mxu0 0
        %904 = vmatprep.subr.bf16.mxu0 0
        %905 = vmatpush1.bf16.xpose.msra.mxu0 0
        %906 = vmatprep.subr.bf16.mxu0 0
        %907 = vmatpush1.bf16.xpose.msra.mxu0 0
        %908 = vmatprep.subr.bf16.mxu0 0
        %909 = vmatpush1.bf16.xpose.msra.mxu0 0
        %910 = vmatprep.subr.bf16.mxu0 0
        %911 = vmatpush1.bf16.xpose.msra.mxu0 0
        %912 = vmatprep.subr.bf16.mxu0 0
        %913 = vmatpush1.bf16.xpose.msra.mxu0 0
        %914 = vmatprep.subr.bf16.mxu0 0
        %915 = vmatpush1.bf16.xpose.msra.mxu0 0
        %916 = vmatprep.subr.bf16.mxu0 0
        %917 = vmatpush1.bf16.xpose.msra.mxu0 %v900
        %918 = vmatprep.subr.bf16.mxu0 0
        %919 = vmatpush2.bf16.xpose.msra.mxu0 0
        %920 = vmatprep.subr.bf16.mxu0 0
        %921 = vmatpush2.bf16.xpose.msra.mxu0 0
        %922 = vmatprep.subr.bf16.mxu0 0
        %923 = vmatpush2.bf16.xpose.msra.mxu0 0
        %924 = vmatprep.subr.bf16.mxu0 0
        %925 = vmatpush2.bf16.xpose.msra.mxu0 0
        %926 = vmatprep.subr.bf16.mxu0 0
        %927 = vmatpush2.bf16.xpose.msra.mxu0 0
        %928 = vmatprep.subr.bf16.mxu0 0
        %929 = vmatpush2.bf16.xpose.msra.mxu0 0
        %930 = vmatprep.subr.bf16.mxu0 0
        %931 = vmatpush2.bf16.xpose.msra.mxu0 0
        %932 = vmatprep.subr.bf16.mxu0 0
        %933 = vmatpush2.bf16.xpose.msra.mxu0 0
        %934 = vmatprep.mubr.bf16.mxu0 0
        %935 = vmatmul.mubr.bf16.gmra.mxu0 %v897
        %v936 = vpop.f32.mrf.mxu0
        %v937 = vadd.f32 0.0, %v936
        %v938 = vpop.f32.mrf.mxu0
        %v939 = vpop.f32.mrf.mxu0
        %v940 = vadd.f32 0.0, %v939
        %v941 = vpop.f32.mrf.mxu0
        %942 = vdwg.mxu0
        %v943 = vsel %vm768, %v937, -inf
        %944 = vmax.xlane.f32.xlu0 %v943
        %v945 = vpop.xlane.xlu0 %944
        %v946 = vsel %vm768, %v940, -inf
        %947 = vmax.xlane.f32.xlu0 %v946
        %v948 = vpop.xlane.xlu0 %947
        %v949 = vsub.f32 %v937, %v945
        %v950 = vsub.f32 %v940, %v948
        %v951 = vmul.f32 %v949, 1.442695
        %v952 = vpow.pop %v951
        %v953 = vmul.f32 %v950, 1.442695
        %v954 = vpow.pop %v953
        %v955 = vsel %vm768, %v952, 0.0
        %956 = vadd.xlane.f32.xlu0 %v955
        %v957 = vpop.xlane.xlu0 %956
        %v958 = vsel %vm768, %v954, 0.0
        %959 = vadd.xlane.f32.xlu0 %v958
        %v960 = vpop.xlane.xlu0 %959
        %v961 = vrcp.pop %v957
        %v962 = vrcp.pop %v960
        %v963 = vmul.f32 %v952, %v961
        %v964 = vmul.f32 %v954, %v962
        %v965 = vpack.c.bf16 %v964, %v963
        %966 = vrot.lane.b32.xlu0 %v843, 112
        %v967 = vpop.permute.xlu0 %966
        %v970 = vsel %vm768, %v965, 0
        %972 = vmatprep.subr.bf16.mxu0 0
        %973 = vmatpush1.bf16.msra.mxu0 0
        %974 = vmatprep.subr.bf16.mxu0 0
        %975 = vmatpush1.bf16.msra.mxu0 0
        %976 = vmatprep.subr.bf16.mxu0 0
        %977 = vmatpush1.bf16.msra.mxu0 0
        %978 = vmatprep.subr.bf16.mxu0 0
        %979 = vmatpush1.bf16.msra.mxu0 0
        %980 = vmatprep.subr.bf16.mxu0 0
        %981 = vmatpush1.bf16.msra.mxu0 0
        %982 = vmatprep.subr.bf16.mxu0 0
        %983 = vmatpush1.bf16.msra.mxu0 0
        %984 = vmatprep.subr.bf16.mxu0 0
        %985 = vmatpush1.bf16.msra.mxu0 0
        %986 = vmatprep.subr.bf16.mxu0 0
        %987 = vmatpush1.bf16.msra.mxu0 %v967
        %988 = vmatprep.subr.bf16.mxu0 0
        %989 = vmatpush2.bf16.msra.mxu0 0
        %990 = vmatprep.subr.bf16.mxu0 0
        %991 = vmatpush2.bf16.msra.mxu0 0
        %992 = vmatprep.subr.bf16.mxu0 0
        %993 = vmatpush2.bf16.msra.mxu0 0
        %994 = vmatprep.subr.bf16.mxu0 0
        %995 = vmatpush2.bf16.msra.mxu0 0
        %996 = vmatprep.subr.bf16.mxu0 0
        %997 = vmatpush2.bf16.msra.mxu0 0
        %998 = vmatprep.subr.bf16.mxu0 0
        %999 = vmatpush2.bf16.msra.mxu0 0
        %1000 = vmatprep.subr.bf16.mxu0 0
        %1001 = vmatpush2.bf16.msra.mxu0 0
        %1002 = vmatprep.subr.bf16.mxu0 0
        %1003 = vmatpush2.bf16.msra.mxu0 0
        %1004 = vmatprep.mubr.bf16.mxu0 0
        %1005 = vmatmul.mubr.bf16.gmra.mxu0 %v970
        %v1006 = vpop.f32.mrf.mxu0
        %v1007 = vadd.f32 0.0, %v1006
        %v1008 = vpop.f32.mrf.mxu0
        %v1009 = vpop.f32.mrf.mxu0
        %v1010 = vadd.f32 0.0, %v1009
        %v1011 = vpop.f32.mrf.mxu0
        %1012 = vdwg.mxu0
        %1015 = vrot.lane.b32.xlu0 %v1007, 16
        %v1016 = vpop.permute.xlu0 %1015
        %1017 = vrot.lane.b32.xlu0 %v1010, 16
        %v1018 = vpop.permute.xlu0 %1017
        %vm1021 = vcmask 261248
        %1022 = vst.msk [vmem:[#allocation4] sm:$0xff] %vm1021, %v1016
        %1023 = vst.msk [vmem:[#allocation4 + $0x8] sm:$0xff] %vm1021, %v1018
        %1024 = vrot.lane.b32.xlu0 %v758, 96
        %v1025 = vpop.permute.xlu0 %1024
        %1026 = vrot.lane.b32.xlu0 %v767, 96
        %v1027 = vpop.permute.xlu0 %1026
        %v1029 = vsel %vm768, %v1025, 0
        %v1032 = vsel %vm768, %v1027, 0
        %1034 = vmatprep.subr.bf16.mxu0 0
        %1035 = vmatpush1.bf16.xpose.msra.mxu0 0
        %1036 = vmatprep.subr.bf16.mxu0 0
        %1037 = vmatpush1.bf16.xpose.msra.mxu0 0
        %1038 = vmatprep.subr.bf16.mxu0 0
        %1039 = vmatpush1.bf16.xpose.msra.mxu0 0
        %1040 = vmatprep.subr.bf16.mxu0 0
        %1041 = vmatpush1.bf16.xpose.msra.mxu0 0
        %1042 = vmatprep.subr.bf16.mxu0 0
        %1043 = vmatpush1.bf16.xpose.msra.mxu0 0
        %1044 = vmatprep.subr.bf16.mxu0 0
        %1045 = vmatpush1.bf16.xpose.msra.mxu0 0
        %1046 = vmatprep.subr.bf16.mxu0 0
        %1047 = vmatpush1.bf16.xpose.msra.mxu0 0
        %1048 = vmatprep.subr.bf16.mxu0 0
        %1049 = vmatpush1.bf16.xpose.msra.mxu0 %v1032
        %1050 = vmatprep.subr.bf16.mxu0 0
        %1051 = vmatpush2.bf16.xpose.msra.mxu0 0
        %1052 = vmatprep.subr.bf16.mxu0 0
        %1053 = vmatpush2.bf16.xpose.msra.mxu0 0
        %1054 = vmatprep.subr.bf16.mxu0 0
        %1055 = vmatpush2.bf16.xpose.msra.mxu0 0
        %1056 = vmatprep.subr.bf16.mxu0 0
        %1057 = vmatpush2.bf16.xpose.msra.mxu0 0
        %1058 = vmatprep.subr.bf16.mxu0 0
        %1059 = vmatpush2.bf16.xpose.msra.mxu0 0
        %1060 = vmatprep.subr.bf16.mxu0 0
        %1061 = vmatpush2.bf16.xpose.msra.mxu0 0
        %1062 = vmatprep.subr.bf16.mxu0 0
        %1063 = vmatpush2.bf16.xpose.msra.mxu0 0
        %1064 = vmatprep.subr.bf16.mxu0 0
        %1065 = vmatpush2.bf16.xpose.msra.mxu0 0
        %1066 = vmatprep.mubr.bf16.mxu0 0
        %1067 = vmatmul.mubr.bf16.gmra.mxu0 %v1029
        %v1068 = vpop.f32.mrf.mxu0
        %v1069 = vadd.f32 0.0, %v1068
        %v1070 = vpop.f32.mrf.mxu0
        %v1071 = vpop.f32.mrf.mxu0
        %v1072 = vadd.f32 0.0, %v1071
        %v1073 = vpop.f32.mrf.mxu0
        %1074 = vdwg.mxu0
        %v1075 = vsel %vm768, %v1069, -inf
        %1076 = vmax.xlane.f32.xlu0 %v1075
        %v1077 = vpop.xlane.xlu0 %1076
        %v1078 = vsel %vm768, %v1072, -inf
        %1079 = vmax.xlane.f32.xlu0 %v1078
        %v1080 = vpop.xlane.xlu0 %1079
        %v1081 = vsub.f32 %v1069, %v1077
        %v1082 = vsub.f32 %v1072, %v1080
        %v1083 = vmul.f32 %v1081, 1.442695
        %v1084 = vpow.pop %v1083
        %v1085 = vmul.f32 %v1082, 1.442695
        %v1086 = vpow.pop %v1085
        %v1087 = vsel %vm768, %v1084, 0.0
        %1088 = vadd.xlane.f32.xlu0 %v1087
        %v1089 = vpop.xlane.xlu0 %1088
        %v1090 = vsel %vm768, %v1086, 0.0
        %1091 = vadd.xlane.f32.xlu0 %v1090
        %v1092 = vpop.xlane.xlu0 %1091
        %v1093 = vrcp.pop %v1089
        %v1094 = vrcp.pop %v1092
        %v1095 = vmul.f32 %v1084, %v1093
        %v1096 = vmul.f32 %v1086, %v1094
        %v1097 = vpack.c.bf16 %v1096, %v1095
        %1098 = vrot.lane.b32.xlu0 %v843, 96
        %v1099 = vpop.permute.xlu0 %1098
        %v1102 = vsel %vm768, %v1097, 0
        %1104 = vmatprep.subr.bf16.mxu0 0
        %1105 = vmatpush1.bf16.msra.mxu0 0
        %1106 = vmatprep.subr.bf16.mxu0 0
        %1107 = vmatpush1.bf16.msra.mxu0 0
        %1108 = vmatprep.subr.bf16.mxu0 0
        %1109 = vmatpush1.bf16.msra.mxu0 0
        %1110 = vmatprep.subr.bf16.mxu0 0
        %1111 = vmatpush1.bf16.msra.mxu0 0
        %1112 = vmatprep.subr.bf16.mxu0 0
        %1113 = vmatpush1.bf16.msra.mxu0 0
        %1114 = vmatprep.subr.bf16.mxu0 0
        %1115 = vmatpush1.bf16.msra.mxu0 0
        %1116 = vmatprep.subr.bf16.mxu0 0
        %1117 = vmatpush1.bf16.msra.mxu0 0
        %1118 = vmatprep.subr.bf16.mxu0 0
        %1119 = vmatpush1.bf16.msra.mxu0 %v1099
        %1120 = vmatprep.subr.bf16.mxu0 0
        %1121 = vmatpush2.bf16.msra.mxu0 0
        %1122 = vmatprep.subr.bf16.mxu0 0
        %1123 = vmatpush2.bf16.msra.mxu0 0
        %1124 = vmatprep.subr.bf16.mxu0 0
        %1125 = vmatpush2.bf16.msra.mxu0 0
        %1126 = vmatprep.subr.bf16.mxu0 0
        %1127 = vmatpush2.bf16.msra.mxu0 0
        %1128 = vmatprep.subr.bf16.mxu0 0
        %1129 = vmatpush2.bf16.msra.mxu0 0
        %1130 = vmatprep.subr.bf16.mxu0 0
        %1131 = vmatpush2.bf16.msra.mxu0 0
        %1132 = vmatprep.subr.bf16.mxu0 0
        %1133 = vmatpush2.bf16.msra.mxu0 0
        %1134 = vmatprep.subr.bf16.mxu0 0
        %1135 = vmatpush2.bf16.msra.mxu0 0
        %1136 = vmatprep.mubr.bf16.mxu0 0
        %1137 = vmatmul.mubr.bf16.gmra.mxu0 %v1102
        %v1138 = vpop.f32.mrf.mxu0
        %v1139 = vadd.f32 0.0, %v1138
        %v1140 = vpop.f32.mrf.mxu0
        %v1141 = vpop.f32.mrf.mxu0
        %v1142 = vadd.f32 0.0, %v1141
        %v1143 = vpop.f32.mrf.mxu0
        %1144 = vdwg.mxu0
        %1147 = vrot.lane.b32.xlu0 %v1139, 32
        %v1148 = vpop.permute.xlu0 %1147
        %1149 = vrot.lane.b32.xlu0 %v1142, 32
        %v1150 = vpop.permute.xlu0 %1149
        %vm1153 = vcmask 392448
        %1154 = vst.msk [vmem:[#allocation4] sm:$0xff] %vm1153, %v1148
        %1155 = vst.msk [vmem:[#allocation4 + $0x8] sm:$0xff] %vm1153, %v1150
        %1156 = vrot.lane.b32.xlu0 %v758, 80
        %v1157 = vpop.permute.xlu0 %1156
        %1158 = vrot.lane.b32.xlu0 %v767, 80
        %v1159 = vpop.permute.xlu0 %1158
        %v1161 = vsel %vm768, %v1157, 0
        %v1164 = vsel %vm768, %v1159, 0
        %1166 = vmatprep.subr.bf16.mxu0 0
        %1167 = vmatpush1.bf16.xpose.msra.mxu0 0
        %1168 = vmatprep.subr.bf16.mxu0 0
        %1169 = vmatpush1.bf16.xpose.msra.mxu0 0
        %1170 = vmatprep.subr.bf16.mxu0 0
        %1171 = vmatpush1.bf16.xpose.msra.mxu0 0
        %1172 = vmatprep.subr.bf16.mxu0 0
        %1173 = vmatpush1.bf16.xpose.msra.mxu0 0
        %1174 = vmatprep.subr.bf16.mxu0 0
        %1175 = vmatpush1.bf16.xpose.msra.mxu0 0
        %1176 = vmatprep.subr.bf16.mxu0 0
        %1177 = vmatpush1.bf16.xpose.msra.mxu0 0
        %1178 = vmatprep.subr.bf16.mxu0 0
        %1179 = vmatpush1.bf16.xpose.msra.mxu0 0
        %1180 = vmatprep.subr.bf16.mxu0 0
        %1181 = vmatpush1.bf16.xpose.msra.mxu0 %v1164
        %1182 = vmatprep.subr.bf16.mxu0 0
        %1183 = vmatpush2.bf16.xpose.msra.mxu0 0
        %1184 = vmatprep.subr.bf16.mxu0 0
        %1185 = vmatpush2.bf16.xpose.msra.mxu0 0
        %1186 = vmatprep.subr.bf16.mxu0 0
        %1187 = vmatpush2.bf16.xpose.msra.mxu0 0
        %1188 = vmatprep.subr.bf16.mxu0 0
        %1189 = vmatpush2.bf16.xpose.msra.mxu0 0
        %1190 = vmatprep.subr.bf16.mxu0 0
        %1191 = vmatpush2.bf16.xpose.msra.mxu0 0
        %1192 = vmatprep.subr.bf16.mxu0 0
        %1193 = vmatpush2.bf16.xpose.msra.mxu0 0
        %1194 = vmatprep.subr.bf16.mxu0 0
        %1195 = vmatpush2.bf16.xpose.msra.mxu0 0
        %1196 = vmatprep.subr.bf16.mxu0 0
        %1197 = vmatpush2.bf16.xpose.msra.mxu0 0
        %1198 = vmatprep.mubr.bf16.mxu0 0
        %1199 = vmatmul.mubr.bf16.gmra.mxu0 %v1161
        %v1200 = vpop.f32.mrf.mxu0
        %v1201 = vadd.f32 0.0, %v1200
        %v1202 = vpop.f32.mrf.mxu0
        %v1203 = vpop.f32.mrf.mxu0
        %v1204 = vadd.f32 0.0, %v1203
        %v1205 = vpop.f32.mrf.mxu0
        %1206 = vdwg.mxu0
        %v1207 = vsel %vm768, %v1201, -inf
        %1208 = vmax.xlane.f32.xlu0 %v1207
        %v1209 = vpop.xlane.xlu0 %1208
        %v1210 = vsel %vm768, %v1204, -inf
        %1211 = vmax.xlane.f32.xlu0 %v1210
        %v1212 = vpop.xlane.xlu0 %1211
        %v1213 = vsub.f32 %v1201, %v1209
        %v1214 = vsub.f32 %v1204, %v1212
        %v1215 = vmul.f32 %v1213, 1.442695
        %v1216 = vpow.pop %v1215
        %v1217 = vmul.f32 %v1214, 1.442695
        %v1218 = vpow.pop %v1217
        %v1219 = vsel %vm768, %v1216, 0.0
        %1220 = vadd.xlane.f32.xlu0 %v1219
        %v1221 = vpop.xlane.xlu0 %1220
        %v1222 = vsel %vm768, %v1218, 0.0
        %1223 = vadd.xlane.f32.xlu0 %v1222
        %v1224 = vpop.xlane.xlu0 %1223
        %v1225 = vrcp.pop %v1221
        %v1226 = vrcp.pop %v1224
        %v1227 = vmul.f32 %v1216, %v1225
        %v1228 = vmul.f32 %v1218, %v1226
        %v1229 = vpack.c.bf16 %v1228, %v1227
        %1230 = vrot.lane.b32.xlu0 %v843, 80
        %v1231 = vpop.permute.xlu0 %1230
        %v1234 = vsel %vm768, %v1229, 0
        %1236 = vmatprep.subr.bf16.mxu0 0
        %1237 = vmatpush1.bf16.msra.mxu0 0
        %1238 = vmatprep.subr.bf16.mxu0 0
        %1239 = vmatpush1.bf16.msra.mxu0 0
        %1240 = vmatprep.subr.bf16.mxu0 0
        %1241 = vmatpush1.bf16.msra.mxu0 0
        %1242 = vmatprep.subr.bf16.mxu0 0
        %1243 = vmatpush1.bf16.msra.mxu0 0
        %1244 = vmatprep.subr.bf16.mxu0 0
        %1245 = vmatpush1.bf16.msra.mxu0 0
        %1246 = vmatprep.subr.bf16.mxu0 0
        %1247 = vmatpush1.bf16.msra.mxu0 0
        %1248 = vmatprep.subr.bf16.mxu0 0
        %1249 = vmatpush1.bf16.msra.mxu0 0
        %1250 = vmatprep.subr.bf16.mxu0 0
        %1251 = vmatpush1.bf16.msra.mxu0 %v1231
        %1252 = vmatprep.subr.bf16.mxu0 0
        %1253 = vmatpush2.bf16.msra.mxu0 0
        %1254 = vmatprep.subr.bf16.mxu0 0
        %1255 = vmatpush2.bf16.msra.mxu0 0
        %1256 = vmatprep.subr.bf16.mxu0 0
        %1257 = vmatpush2.bf16.msra.mxu0 0
        %1258 = vmatprep.subr.bf16.mxu0 0
        %1259 = vmatpush2.bf16.msra.mxu0 0
        %1260 = vmatprep.subr.bf16.mxu0 0
        %1261 = vmatpush2.bf16.msra.mxu0 0
        %1262 = vmatprep.subr.bf16.mxu0 0
        %1263 = vmatpush2.bf16.msra.mxu0 0
        %1264 = vmatprep.subr.bf16.mxu0 0
        %1265 = vmatpush2.bf16.msra.mxu0 0
        %1266 = vmatprep.subr.bf16.mxu0 0
        %1267 = vmatpush2.bf16.msra.mxu0 0
        %1268 = vmatprep.mubr.bf16.mxu0 0
        %1269 = vmatmul.mubr.bf16.gmra.mxu0 %v1234
        %v1270 = vpop.f32.mrf.mxu0
        %v1271 = vadd.f32 0.0, %v1270
        %v1272 = vpop.f32.mrf.mxu0
        %v1273 = vpop.f32.mrf.mxu0
        %v1274 = vadd.f32 0.0, %v1273
        %v1275 = vpop.f32.mrf.mxu0
        %1276 = vdwg.mxu0
        %1279 = vrot.lane.b32.xlu0 %v1271, 48
        %v1280 = vpop.permute.xlu0 %1279
        %1281 = vrot.lane.b32.xlu0 %v1274, 48
        %v1282 = vpop.permute.xlu0 %1281
        %vm1285 = vcmask 523648
        %1286 = vst.msk [vmem:[#allocation4] sm:$0xff] %vm1285, %v1280
        %1287 = vst.msk [vmem:[#allocation4 + $0x8] sm:$0xff] %vm1285, %v1282
        %1288 = vrot.lane.b32.xlu0 %v758, 64
        %v1289 = vpop.permute.xlu0 %1288
        %1290 = vrot.lane.b32.xlu0 %v767, 64
        %v1291 = vpop.permute.xlu0 %1290
        %v1293 = vsel %vm768, %v1289, 0
        %v1296 = vsel %vm768, %v1291, 0
        %1298 = vmatprep.subr.bf16.mxu0 0
        %1299 = vmatpush1.bf16.xpose.msra.mxu0 0
        %1300 = vmatprep.subr.bf16.mxu0 0
        %1301 = vmatpush1.bf16.xpose.msra.mxu0 0
        %1302 = vmatprep.subr.bf16.mxu0 0
        %1303 = vmatpush1.bf16.xpose.msra.mxu0 0
        %1304 = vmatprep.subr.bf16.mxu0 0
        %1305 = vmatpush1.bf16.xpose.msra.mxu0 0
        %1306 = vmatprep.subr.bf16.mxu0 0
        %1307 = vmatpush1.bf16.xpose.msra.mxu0 0
        %1308 = vmatprep.subr.bf16.mxu0 0
        %1309 = vmatpush1.bf16.xpose.msra.mxu0 0
        %1310 = vmatprep.subr.bf16.mxu0 0
        %1311 = vmatpush1.bf16.xpose.msra.mxu0 0
        %1312 = vmatprep.subr.bf16.mxu0 0
        %1313 = vmatpush1.bf16.xpose.msra.mxu0 %v1296
        %1314 = vmatprep.subr.bf16.mxu0 0
        %1315 = vmatpush2.bf16.xpose.msra.mxu0 0
        %1316 = vmatprep.subr.bf16.mxu0 0
        %1317 = vmatpush2.bf16.xpose.msra.mxu0 0
        %1318 = vmatprep.subr.bf16.mxu0 0
        %1319 = vmatpush2.bf16.xpose.msra.mxu0 0
        %1320 = vmatprep.subr.bf16.mxu0 0
        %1321 = vmatpush2.bf16.xpose.msra.mxu0 0
        %1322 = vmatprep.subr.bf16.mxu0 0
        %1323 = vmatpush2.bf16.xpose.msra.mxu0 0
        %1324 = vmatprep.subr.bf16.mxu0 0
        %1325 = vmatpush2.bf16.xpose.msra.mxu0 0
        %1326 = vmatprep.subr.bf16.mxu0 0
        %1327 = vmatpush2.bf16.xpose.msra.mxu0 0
        %1328 = vmatprep.subr.bf16.mxu0 0
        %1329 = vmatpush2.bf16.xpose.msra.mxu0 0
        %1330 = vmatprep.mubr.bf16.mxu0 0
        %1331 = vmatmul.mubr.bf16.gmra.mxu0 %v1293
        %v1332 = vpop.f32.mrf.mxu0
        %v1333 = vadd.f32 0.0, %v1332
        %v1334 = vpop.f32.mrf.mxu0
        %v1335 = vpop.f32.mrf.mxu0
        %v1336 = vadd.f32 0.0, %v1335
        %v1337 = vpop.f32.mrf.mxu0
        %1338 = vdwg.mxu0
        %v1339 = vsel %vm768, %v1333, -inf
        %1340 = vmax.xlane.f32.xlu0 %v1339
        %v1341 = vpop.xlane.xlu0 %1340
        %v1342 = vsel %vm768, %v1336, -inf
        %1343 = vmax.xlane.f32.xlu0 %v1342
        %v1344 = vpop.xlane.xlu0 %1343
        %v1345 = vsub.f32 %v1333, %v1341
        %v1346 = vsub.f32 %v1336, %v1344
        %v1347 = vmul.f32 %v1345, 1.442695
        %v1348 = vpow.pop %v1347
        %v1349 = vmul.f32 %v1346, 1.442695
        %v1350 = vpow.pop %v1349
        %v1351 = vsel %vm768, %v1348, 0.0
        %1352 = vadd.xlane.f32.xlu0 %v1351
        %v1353 = vpop.xlane.xlu0 %1352
        %v1354 = vsel %vm768, %v1350, 0.0
        %1355 = vadd.xlane.f32.xlu0 %v1354
        %v1356 = vpop.xlane.xlu0 %1355
        %v1357 = vrcp.pop %v1353
        %v1358 = vrcp.pop %v1356
        %v1359 = vmul.f32 %v1348, %v1357
        %v1360 = vmul.f32 %v1350, %v1358
        %v1361 = vpack.c.bf16 %v1360, %v1359
        %1362 = vrot.lane.b32.xlu0 %v843, 64
        %v1363 = vpop.permute.xlu0 %1362
        %v1366 = vsel %vm768, %v1361, 0
        %1368 = vmatprep.subr.bf16.mxu0 0
        %1369 = vmatpush1.bf16.msra.mxu0 0
        %1370 = vmatprep.subr.bf16.mxu0 0
        %1371 = vmatpush1.bf16.msra.mxu0 0
        %1372 = vmatprep.subr.bf16.mxu0 0
        %1373 = vmatpush1.bf16.msra.mxu0 0
        %1374 = vmatprep.subr.bf16.mxu0 0
        %1375 = vmatpush1.bf16.msra.mxu0 0
        %1376 = vmatprep.subr.bf16.mxu0 0
        %1377 = vmatpush1.bf16.msra.mxu0 0
        %1378 = vmatprep.subr.bf16.mxu0 0
        %1379 = vmatpush1.bf16.msra.mxu0 0
        %1380 = vmatprep.subr.bf16.mxu0 0
        %1381 = vmatpush1.bf16.msra.mxu0 0
        %1382 = vmatprep.subr.bf16.mxu0 0
        %1383 = vmatpush1.bf16.msra.mxu0 %v1363
        %1384 = vmatprep.subr.bf16.mxu0 0
        %1385 = vmatpush2.bf16.msra.mxu0 0
        %1386 = vmatprep.subr.bf16.mxu0 0
        %1387 = vmatpush2.bf16.msra.mxu0 0
        %1388 = vmatprep.subr.bf16.mxu0 0
        %1389 = vmatpush2.bf16.msra.mxu0 0
        %1390 = vmatprep.subr.bf16.mxu0 0
        %1391 = vmatpush2.bf16.msra.mxu0 0
        %1392 = vmatprep.subr.bf16.mxu0 0
        %1393 = vmatpush2.bf16.msra.mxu0 0
        %1394 = vmatprep.subr.bf16.mxu0 0
        %1395 = vmatpush2.bf16.msra.mxu0 0
        %1396 = vmatprep.subr.bf16.mxu0 0
        %1397 = vmatpush2.bf16.msra.mxu0 0
        %1398 = vmatprep.subr.bf16.mxu0 0
        %1399 = vmatpush2.bf16.msra.mxu0 0
        %1400 = vmatprep.mubr.bf16.mxu0 0
        %1401 = vmatmul.mubr.bf16.gmra.mxu0 %v1366
        %v1402 = vpop.f32.mrf.mxu0
        %v1403 = vadd.f32 0.0, %v1402
        %v1404 = vpop.f32.mrf.mxu0
        %v1405 = vpop.f32.mrf.mxu0
        %v1406 = vadd.f32 0.0, %v1405
        %v1407 = vpop.f32.mrf.mxu0
        %1408 = vdwg.mxu0
        %1411 = vrot.lane.b32.xlu0 %v1403, 64
        %v1412 = vpop.permute.xlu0 %1411
        %1413 = vrot.lane.b32.xlu0 %v1406, 64
        %v1414 = vpop.permute.xlu0 %1413
        %vm1417 = vcmask 654848
        %1418 = vst.msk [vmem:[#allocation4] sm:$0xff] %vm1417, %v1412
        %1419 = vst.msk [vmem:[#allocation4 + $0x8] sm:$0xff] %vm1417, %v1414
        %1420 = vrot.lane.b32.xlu0 %v758, 48
        %v1421 = vpop.permute.xlu0 %1420
        %1422 = vrot.lane.b32.xlu0 %v767, 48
        %v1423 = vpop.permute.xlu0 %1422
        %v1425 = vsel %vm768, %v1421, 0
        %v1428 = vsel %vm768, %v1423, 0
        %1430 = vmatprep.subr.bf16.mxu0 0
        %1431 = vmatpush1.bf16.xpose.msra.mxu0 0
        %1432 = vmatprep.subr.bf16.mxu0 0
        %1433 = vmatpush1.bf16.xpose.msra.mxu0 0
        %1434 = vmatprep.subr.bf16.mxu0 0
        %1435 = vmatpush1.bf16.xpose.msra.mxu0 0
        %1436 = vmatprep.subr.bf16.mxu0 0
        %1437 = vmatpush1.bf16.xpose.msra.mxu0 0
        %1438 = vmatprep.subr.bf16.mxu0 0
        %1439 = vmatpush1.bf16.xpose.msra.mxu0 0
        %1440 = vmatprep.subr.bf16.mxu0 0
        %1441 = vmatpush1.bf16.xpose.msra.mxu0 0
        %1442 = vmatprep.subr.bf16.mxu0 0
        %1443 = vmatpush1.bf16.xpose.msra.mxu0 0
        %1444 = vmatprep.subr.bf16.mxu0 0
        %1445 = vmatpush1.bf16.xpose.msra.mxu0 %v1428
        %1446 = vmatprep.subr.bf16.mxu0 0
        %1447 = vmatpush2.bf16.xpose.msra.mxu0 0
        %1448 = vmatprep.subr.bf16.mxu0 0
        %1449 = vmatpush2.bf16.xpose.msra.mxu0 0
        %1450 = vmatprep.subr.bf16.mxu0 0
        %1451 = vmatpush2.bf16.xpose.msra.mxu0 0
        %1452 = vmatprep.subr.bf16.mxu0 0
        %1453 = vmatpush2.bf16.xpose.msra.mxu0 0
        %1454 = vmatprep.subr.bf16.mxu0 0
        %1455 = vmatpush2.bf16.xpose.msra.mxu0 0
        %1456 = vmatprep.subr.bf16.mxu0 0
        %1457 = vmatpush2.bf16.xpose.msra.mxu0 0
        %1458 = vmatprep.subr.bf16.mxu0 0
        %1459 = vmatpush2.bf16.xpose.msra.mxu0 0
        %1460 = vmatprep.subr.bf16.mxu0 0
        %1461 = vmatpush2.bf16.xpose.msra.mxu0 0
        %1462 = vmatprep.mubr.bf16.mxu0 0
        %1463 = vmatmul.mubr.bf16.gmra.mxu0 %v1425
        %v1464 = vpop.f32.mrf.mxu0
        %v1465 = vadd.f32 0.0, %v1464
        %v1466 = vpop.f32.mrf.mxu0
        %v1467 = vpop.f32.mrf.mxu0
        %v1468 = vadd.f32 0.0, %v1467
        %v1469 = vpop.f32.mrf.mxu0
        %1470 = vdwg.mxu0
        %v1471 = vsel %vm768, %v1465, -inf
        %1472 = vmax.xlane.f32.xlu0 %v1471
        %v1473 = vpop.xlane.xlu0 %1472
        %v1474 = vsel %vm768, %v1468, -inf
        %1475 = vmax.xlane.f32.xlu0 %v1474
        %v1476 = vpop.xlane.xlu0 %1475
        %v1477 = vsub.f32 %v1465, %v1473
        %v1478 = vsub.f32 %v1468, %v1476
        %v1479 = vmul.f32 %v1477, 1.442695
        %v1480 = vpow.pop %v1479
        %v1481 = vmul.f32 %v1478, 1.442695
        %v1482 = vpow.pop %v1481
        %v1483 = vsel %vm768, %v1480, 0.0
        %1484 = vadd.xlane.f32.xlu0 %v1483
        %v1485 = vpop.xlane.xlu0 %1484
        %v1486 = vsel %vm768, %v1482, 0.0
        %1487 = vadd.xlane.f32.xlu0 %v1486
        %v1488 = vpop.xlane.xlu0 %1487
        %v1489 = vrcp.pop %v1485
        %v1490 = vrcp.pop %v1488
        %v1491 = vmul.f32 %v1480, %v1489
        %v1492 = vmul.f32 %v1482, %v1490
        %v1493 = vpack.c.bf16 %v1492, %v1491
        %1494 = vrot.lane.b32.xlu0 %v843, 48
        %v1495 = vpop.permute.xlu0 %1494
        %v1498 = vsel %vm768, %v1493, 0
        %1500 = vmatprep.subr.bf16.mxu0 0
        %1501 = vmatpush1.bf16.msra.mxu0 0
        %1502 = vmatprep.subr.bf16.mxu0 0
        %1503 = vmatpush1.bf16.msra.mxu0 0
        %1504 = vmatprep.subr.bf16.mxu0 0
        %1505 = vmatpush1.bf16.msra.mxu0 0
        %1506 = vmatprep.subr.bf16.mxu0 0
        %1507 = vmatpush1.bf16.msra.mxu0 0
        %1508 = vmatprep.subr.bf16.mxu0 0
        %1509 = vmatpush1.bf16.msra.mxu0 0
        %1510 = vmatprep.subr.bf16.mxu0 0
        %1511 = vmatpush1.bf16.msra.mxu0 0
        %1512 = vmatprep.subr.bf16.mxu0 0
        %1513 = vmatpush1.bf16.msra.mxu0 0
        %1514 = vmatprep.subr.bf16.mxu0 0
        %1515 = vmatpush1.bf16.msra.mxu0 %v1495
        %1516 = vmatprep.subr.bf16.mxu0 0
        %1517 = vmatpush2.bf16.msra.mxu0 0
        %1518 = vmatprep.subr.bf16.mxu0 0
        %1519 = vmatpush2.bf16.msra.mxu0 0
        %1520 = vmatprep.subr.bf16.mxu0 0
        %1521 = vmatpush2.bf16.msra.mxu0 0
        %1522 = vmatprep.subr.bf16.mxu0 0
        %1523 = vmatpush2.bf16.msra.mxu0 0
        %1524 = vmatprep.subr.bf16.mxu0 0
        %1525 = vmatpush2.bf16.msra.mxu0 0
        %1526 = vmatprep.subr.bf16.mxu0 0
        %1527 = vmatpush2.bf16.msra.mxu0 0
        %1528 = vmatprep.subr.bf16.mxu0 0
        %1529 = vmatpush2.bf16.msra.mxu0 0
        %1530 = vmatprep.subr.bf16.mxu0 0
        %1531 = vmatpush2.bf16.msra.mxu0 0
        %1532 = vmatprep.mubr.bf16.mxu0 0
        %1533 = vmatmul.mubr.bf16.gmra.mxu0 %v1498
        %v1534 = vpop.f32.mrf.mxu0
        %v1535 = vadd.f32 0.0, %v1534
        %v1536 = vpop.f32.mrf.mxu0
        %v1537 = vpop.f32.mrf.mxu0
        %v1538 = vadd.f32 0.0, %v1537
        %v1539 = vpop.f32.mrf.mxu0
        %1540 = vdwg.mxu0
        %1543 = vrot.lane.b32.xlu0 %v1535, 80
        %v1544 = vpop.permute.xlu0 %1543
        %1545 = vrot.lane.b32.xlu0 %v1538, 80
        %v1546 = vpop.permute.xlu0 %1545
        %vm1549 = vcmask 786048
        %1550 = vst.msk [vmem:[#allocation4] sm:$0xff] %vm1549, %v1544
        %1551 = vst.msk [vmem:[#allocation4 + $0x8] sm:$0xff] %vm1549, %v1546
        %1552 = vrot.lane.b32.xlu0 %v758, 32
        %v1553 = vpop.permute.xlu0 %1552
        %1554 = vrot.lane.b32.xlu0 %v767, 32
        %v1555 = vpop.permute.xlu0 %1554
        %v1557 = vsel %vm768, %v1553, 0
        %v1560 = vsel %vm768, %v1555, 0
        %1562 = vmatprep.subr.bf16.mxu0 0
        %1563 = vmatpush1.bf16.xpose.msra.mxu0 0
        %1564 = vmatprep.subr.bf16.mxu0 0
        %1565 = vmatpush1.bf16.xpose.msra.mxu0 0
        %1566 = vmatprep.subr.bf16.mxu0 0
        %1567 = vmatpush1.bf16.xpose.msra.mxu0 0
        %1568 = vmatprep.subr.bf16.mxu0 0
        %1569 = vmatpush1.bf16.xpose.msra.mxu0 0
        %1570 = vmatprep.subr.bf16.mxu0 0
        %1571 = vmatpush1.bf16.xpose.msra.mxu0 0
        %1572 = vmatprep.subr.bf16.mxu0 0
        %1573 = vmatpush1.bf16.xpose.msra.mxu0 0
        %1574 = vmatprep.subr.bf16.mxu0 0
        %1575 = vmatpush1.bf16.xpose.msra.mxu0 0
        %1576 = vmatprep.subr.bf16.mxu0 0
        %1577 = vmatpush1.bf16.xpose.msra.mxu0 %v1560
        %1578 = vmatprep.subr.bf16.mxu0 0
        %1579 = vmatpush2.bf16.xpose.msra.mxu0 0
        %1580 = vmatprep.subr.bf16.mxu0 0
        %1581 = vmatpush2.bf16.xpose.msra.mxu0 0
        %1582 = vmatprep.subr.bf16.mxu0 0
        %1583 = vmatpush2.bf16.xpose.msra.mxu0 0
        %1584 = vmatprep.subr.bf16.mxu0 0
        %1585 = vmatpush2.bf16.xpose.msra.mxu0 0
        %1586 = vmatprep.subr.bf16.mxu0 0
        %1587 = vmatpush2.bf16.xpose.msra.mxu0 0
        %1588 = vmatprep.subr.bf16.mxu0 0
        %1589 = vmatpush2.bf16.xpose.msra.mxu0 0
        %1590 = vmatprep.subr.bf16.mxu0 0
        %1591 = vmatpush2.bf16.xpose.msra.mxu0 0
        %1592 = vmatprep.subr.bf16.mxu0 0
        %1593 = vmatpush2.bf16.xpose.msra.mxu0 0
        %1594 = vmatprep.mubr.bf16.mxu0 0
        %1595 = vmatmul.mubr.bf16.gmra.mxu0 %v1557
        %v1596 = vpop.f32.mrf.mxu0
        %v1597 = vadd.f32 0.0, %v1596
        %v1598 = vpop.f32.mrf.mxu0
        %v1599 = vpop.f32.mrf.mxu0
        %v1600 = vadd.f32 0.0, %v1599
        %v1601 = vpop.f32.mrf.mxu0
        %1602 = vdwg.mxu0
        %v1603 = vsel %vm768, %v1597, -inf
        %1604 = vmax.xlane.f32.xlu0 %v1603
        %v1605 = vpop.xlane.xlu0 %1604
        %v1606 = vsel %vm768, %v1600, -inf
        %1607 = vmax.xlane.f32.xlu0 %v1606
        %v1608 = vpop.xlane.xlu0 %1607
        %v1609 = vsub.f32 %v1597, %v1605
        %v1610 = vsub.f32 %v1600, %v1608
        %v1611 = vmul.f32 %v1609, 1.442695
        %v1612 = vpow.pop %v1611
        %v1613 = vmul.f32 %v1610, 1.442695
        %v1614 = vpow.pop %v1613
        %v1615 = vsel %vm768, %v1612, 0.0
        %1616 = vadd.xlane.f32.xlu0 %v1615
        %v1617 = vpop.xlane.xlu0 %1616
        %v1618 = vsel %vm768, %v1614, 0.0
        %1619 = vadd.xlane.f32.xlu0 %v1618
        %v1620 = vpop.xlane.xlu0 %1619
        %v1621 = vrcp.pop %v1617
        %v1622 = vrcp.pop %v1620
        %v1623 = vmul.f32 %v1612, %v1621
        %v1624 = vmul.f32 %v1614, %v1622
        %v1625 = vpack.c.bf16 %v1624, %v1623
        %1626 = vrot.lane.b32.xlu0 %v843, 32
        %v1627 = vpop.permute.xlu0 %1626
        %v1630 = vsel %vm768, %v1625, 0
        %1632 = vmatprep.subr.bf16.mxu0 0
        %1633 = vmatpush1.bf16.msra.mxu0 0
        %1634 = vmatprep.subr.bf16.mxu0 0
        %1635 = vmatpush1.bf16.msra.mxu0 0
        %1636 = vmatprep.subr.bf16.mxu0 0
        %1637 = vmatpush1.bf16.msra.mxu0 0
        %1638 = vmatprep.subr.bf16.mxu0 0
        %1639 = vmatpush1.bf16.msra.mxu0 0
        %1640 = vmatprep.subr.bf16.mxu0 0
        %1641 = vmatpush1.bf16.msra.mxu0 0
        %1642 = vmatprep.subr.bf16.mxu0 0
        %1643 = vmatpush1.bf16.msra.mxu0 0
        %1644 = vmatprep.subr.bf16.mxu0 0
        %1645 = vmatpush1.bf16.msra.mxu0 0
        %1646 = vmatprep.subr.bf16.mxu0 0
        %1647 = vmatpush1.bf16.msra.mxu0 %v1627
        %1648 = vmatprep.subr.bf16.mxu0 0
        %1649 = vmatpush2.bf16.msra.mxu0 0
        %1650 = vmatprep.subr.bf16.mxu0 0
        %1651 = vmatpush2.bf16.msra.mxu0 0
        %1652 = vmatprep.subr.bf16.mxu0 0
        %1653 = vmatpush2.bf16.msra.mxu0 0
        %1654 = vmatprep.subr.bf16.mxu0 0
        %1655 = vmatpush2.bf16.msra.mxu0 0
        %1656 = vmatprep.subr.bf16.mxu0 0
        %1657 = vmatpush2.bf16.msra.mxu0 0
        %1658 = vmatprep.subr.bf16.mxu0 0
        %1659 = vmatpush2.bf16.msra.mxu0 0
        %1660 = vmatprep.subr.bf16.mxu0 0
        %1661 = vmatpush2.bf16.msra.mxu0 0
        %1662 = vmatprep.subr.bf16.mxu0 0
        %1663 = vmatpush2.bf16.msra.mxu0 0
        %1664 = vmatprep.mubr.bf16.mxu0 0
        %1665 = vmatmul.mubr.bf16.gmra.mxu0 %v1630
        %v1666 = vpop.f32.mrf.mxu0
        %v1667 = vadd.f32 0.0, %v1666
        %v1668 = vpop.f32.mrf.mxu0
        %v1669 = vpop.f32.mrf.mxu0
        %v1670 = vadd.f32 0.0, %v1669
        %v1671 = vpop.f32.mrf.mxu0
        %1672 = vdwg.mxu0
        %1675 = vrot.lane.b32.xlu0 %v1667, 96
        %v1676 = vpop.permute.xlu0 %1675
        %1677 = vrot.lane.b32.xlu0 %v1670, 96
        %v1678 = vpop.permute.xlu0 %1677
        %vm1681 = vcmask 917248
        %1682 = vst.msk [vmem:[#allocation4] sm:$0xff] %vm1681, %v1676
        %1683 = vst.msk [vmem:[#allocation4 + $0x8] sm:$0xff] %vm1681, %v1678
        %1684 = vrot.lane.b32.xlu0 %v758, 16
        %v1685 = vpop.permute.xlu0 %1684
        %1686 = vrot.lane.b32.xlu0 %v767, 16
        %v1687 = vpop.permute.xlu0 %1686
        %v1689 = vsel %vm768, %v1685, 0
        %v1692 = vsel %vm768, %v1687, 0
        %1694 = vmatprep.subr.bf16.mxu0 0
        %1695 = vmatpush1.bf16.xpose.msra.mxu0 0
        %1696 = vmatprep.subr.bf16.mxu0 0
        %1697 = vmatpush1.bf16.xpose.msra.mxu0 0
        %1698 = vmatprep.subr.bf16.mxu0 0
        %1699 = vmatpush1.bf16.xpose.msra.mxu0 0
        %1700 = vmatprep.subr.bf16.mxu0 0
        %1701 = vmatpush1.bf16.xpose.msra.mxu0 0
        %1702 = vmatprep.subr.bf16.mxu0 0
        %1703 = vmatpush1.bf16.xpose.msra.mxu0 0
        %1704 = vmatprep.subr.bf16.mxu0 0
        %1705 = vmatpush1.bf16.xpose.msra.mxu0 0
        %1706 = vmatprep.subr.bf16.mxu0 0
        %1707 = vmatpush1.bf16.xpose.msra.mxu0 0
        %1708 = vmatprep.subr.bf16.mxu0 0
        %1709 = vmatpush1.bf16.xpose.msra.mxu0 %v1692
        %1710 = vmatprep.subr.bf16.mxu0 0
        %1711 = vmatpush2.bf16.xpose.msra.mxu0 0
        %1712 = vmatprep.subr.bf16.mxu0 0
        %1713 = vmatpush2.bf16.xpose.msra.mxu0 0
        %1714 = vmatprep.subr.bf16.mxu0 0
        %1715 = vmatpush2.bf16.xpose.msra.mxu0 0
        %1716 = vmatprep.subr.bf16.mxu0 0
        %1717 = vmatpush2.bf16.xpose.msra.mxu0 0
        %1718 = vmatprep.subr.bf16.mxu0 0
        %1719 = vmatpush2.bf16.xpose.msra.mxu0 0
        %1720 = vmatprep.subr.bf16.mxu0 0
        %1721 = vmatpush2.bf16.xpose.msra.mxu0 0
        %1722 = vmatprep.subr.bf16.mxu0 0
        %1723 = vmatpush2.bf16.xpose.msra.mxu0 0
        %1724 = vmatprep.subr.bf16.mxu0 0
        %1725 = vmatpush2.bf16.xpose.msra.mxu0 0
        %1726 = vmatprep.mubr.bf16.mxu0 0
        %1727 = vmatmul.mubr.bf16.gmra.mxu0 %v1689
        %v1728 = vpop.f32.mrf.mxu0
        %v1729 = vadd.f32 0.0, %v1728
        %v1730 = vpop.f32.mrf.mxu0
        %v1731 = vpop.f32.mrf.mxu0
        %v1732 = vadd.f32 0.0, %v1731
        %v1733 = vpop.f32.mrf.mxu0
        %1734 = vdwg.mxu0
        %v1735 = vsel %vm768, %v1729, -inf
        %1736 = vmax.xlane.f32.xlu0 %v1735
        %v1737 = vpop.xlane.xlu0 %1736
        %v1738 = vsel %vm768, %v1732, -inf
        %1739 = vmax.xlane.f32.xlu0 %v1738
        %v1740 = vpop.xlane.xlu0 %1739
        %v1741 = vsub.f32 %v1729, %v1737
        %v1742 = vsub.f32 %v1732, %v1740
        %v1743 = vmul.f32 %v1741, 1.442695
        %v1744 = vpow.pop %v1743
        %v1745 = vmul.f32 %v1742, 1.442695
        %v1746 = vpow.pop %v1745
        %v1747 = vsel %vm768, %v1744, 0.0
        %1748 = vadd.xlane.f32.xlu0 %v1747
        %v1749 = vpop.xlane.xlu0 %1748
        %v1750 = vsel %vm768, %v1746, 0.0
        %1751 = vadd.xlane.f32.xlu0 %v1750
        %v1752 = vpop.xlane.xlu0 %1751
        %v1753 = vrcp.pop %v1749
        %v1754 = vrcp.pop %v1752
        %v1755 = vmul.f32 %v1744, %v1753
        %v1756 = vmul.f32 %v1746, %v1754
        %v1757 = vpack.c.bf16 %v1756, %v1755
        %1758 = vrot.lane.b32.xlu0 %v843, 16
        %v1759 = vpop.permute.xlu0 %1758
        %v1762 = vsel %vm768, %v1757, 0
        %1764 = vmatprep.subr.bf16.mxu0 0
        %1765 = vmatpush1.bf16.msra.mxu0 0
        %1766 = vmatprep.subr.bf16.mxu0 0
        %1767 = vmatpush1.bf16.msra.mxu0 0
        %1768 = vmatprep.subr.bf16.mxu0 0
        %1769 = vmatpush1.bf16.msra.mxu0 0
        %1770 = vmatprep.subr.bf16.mxu0 0
        %1771 = vmatpush1.bf16.msra.mxu0 0
        %1772 = vmatprep.subr.bf16.mxu0 0
        %1773 = vmatpush1.bf16.msra.mxu0 0
        %1774 = vmatprep.subr.bf16.mxu0 0
        %1775 = vmatpush1.bf16.msra.mxu0 0
        %1776 = vmatprep.subr.bf16.mxu0 0
        %1777 = vmatpush1.bf16.msra.mxu0 0
        %1778 = vmatprep.subr.bf16.mxu0 0
        %1779 = vmatpush1.bf16.msra.mxu0 %v1759
        %1780 = vmatprep.subr.bf16.mxu0 0
        %1781 = vmatpush2.bf16.msra.mxu0 0
        %1782 = vmatprep.subr.bf16.mxu0 0
        %1783 = vmatpush2.bf16.msra.mxu0 0
        %1784 = vmatprep.subr.bf16.mxu0 0
        %1785 = vmatpush2.bf16.msra.mxu0 0
        %1786 = vmatprep.subr.bf16.mxu0 0
        %1787 = vmatpush2.bf16.msra.mxu0 0
        %1788 = vmatprep.subr.bf16.mxu0 0
        %1789 = vmatpush2.bf16.msra.mxu0 0
        %1790 = vmatprep.subr.bf16.mxu0 0
        %1791 = vmatpush2.bf16.msra.mxu0 0
        %1792 = vmatprep.subr.bf16.mxu0 0
        %1793 = vmatpush2.bf16.msra.mxu0 0
        %1794 = vmatprep.subr.bf16.mxu0 0
        %1795 = vmatpush2.bf16.msra.mxu0 0
        %1796 = vmatprep.mubr.bf16.mxu0 0
        %1797 = vmatmul.mubr.bf16.gmra.mxu0 %v1762
        %v1798 = vpop.f32.mrf.mxu0
        %v1799 = vadd.f32 0.0, %v1798
        %v1800 = vpop.f32.mrf.mxu0
        %v1801 = vpop.f32.mrf.mxu0
        %v1802 = vadd.f32 0.0, %v1801
        %v1803 = vpop.f32.mrf.mxu0
        %1804 = vdwg.mxu0
        %1807 = vrot.lane.b32.xlu0 %v1799, 112
        %v1808 = vpop.permute.xlu0 %1807
        %1809 = vrot.lane.b32.xlu0 %v1802, 112
        %v1810 = vpop.permute.xlu0 %1809
        %vm1813 = vcmask 1048448
        %1814 = vst.msk [vmem:[#allocation4] sm:$0xff] %vm1813, %v1808
        %1815 = vst.msk [vmem:[#allocation4 + $0x8] sm:$0xff] %vm1813, %v1810
        %v1816 = vld [vmem:[#allocation4] sm:$0xff]
        %v1817 = vld [vmem:[#allocation4 + $0x8] sm:$0xff]
        %v1818 = vpack.c.bf16 %v1817, %v1816
        %v1819 = vld [vmem:[#allocation13] sm:$0xf]
        %v1820 = vld [vmem:[#allocation13 + $0x4] sm:$0xf]
        %v1821 = vld [vmem:[#allocation13 + $0x8] sm:$0xf]
        %v1822 = vld [vmem:[#allocation13 + $0xc] sm:$0xf]
        %v1823 = vld [vmem:[#allocation13 + $0x10] sm:$0xf]
        %v1824 = vld [vmem:[#allocation13 + $0x14] sm:$0xf]
        %v1825 = vld [vmem:[#allocation13 + $0x18] sm:$0xf]
        %v1826 = vld [vmem:[#allocation13 + $0x1c] sm:$0xf]
        %v1827 = vld [vmem:[#allocation13 + $0x20] sm:$0xf]
        %v1828 = vld [vmem:[#allocation13 + $0x24] sm:$0xf]
        %v1829 = vld [vmem:[#allocation13 + $0x28] sm:$0xf]
        %v1830 = vld [vmem:[#allocation13 + $0x2c] sm:$0xf]
        %v1831 = vld [vmem:[#allocation13 + $0x30] sm:$0xf]
        %v1832 = vld [vmem:[#allocation13 + $0x34] sm:$0xf]
        %v1833 = vld [vmem:[#allocation13 + $0x38] sm:$0xf]
        %v1834 = vld [vmem:[#allocation13 + $0x3c] sm:$0xf]
        %v1835 = vld [vmem:[%s6] sm:$0x1]
        %v1837 = vlaneseq
        %v1838 = vshrl.u32 %v1837, 7
        %v1839 = vsub.s32 0, %v1838
        %v1840 = vrot.slane %v1835, %v1839
        %v1858 = vunpack.c.l.b16 %v1819
        %v1859 = vunpack.c.l.b16 %v1820
        %v1860 = vunpack.c.l.b16 %v1821
        %v1861 = vunpack.c.l.b16 %v1822
        %v1862 = vunpack.c.l.b16 %v1823
        %v1863 = vunpack.c.l.b16 %v1824
        %v1864 = vunpack.c.l.b16 %v1825
        %v1865 = vunpack.c.l.b16 %v1826
        %v1866 = vunpack.c.l.b16 %v1827
        %v1867 = vunpack.c.l.b16 %v1828
        %v1868 = vunpack.c.l.b16 %v1829
        %v1869 = vunpack.c.l.b16 %v1830
        %v1870 = vunpack.c.l.b16 %v1831
        %v1871 = vunpack.c.l.b16 %v1832
        %v1872 = vunpack.c.l.b16 %v1833
        %v1873 = vunpack.c.l.b16 %v1834
        %v1874 = vpack.c.b16 %v1859, %v1858
        %v1875 = vpack.c.b16 %v1861, %v1860
        %v1876 = vpack.c.b16 %v1863, %v1862
        %v1877 = vpack.c.b16 %v1865, %v1864
        %v1878 = vpack.c.b16 %v1867, %v1866
        %v1879 = vpack.c.b16 %v1869, %v1868
        %v1880 = vpack.c.b16 %v1871, %v1870
        %v1881 = vpack.c.b16 %v1873, %v1872
        %1890 = vmatprep.subr.bf16.mxu0 0
        %1891 = vmatpush1.bf16.msra.mxu0 %v1881
        %1892 = vmatprep.subr.bf16.mxu0 0
        %1893 = vmatpush1.bf16.msra.mxu0 %v1880
        %1894 = vmatprep.subr.bf16.mxu0 0
        %1895 = vmatpush1.bf16.msra.mxu0 %v1879
        %1896 = vmatprep.subr.bf16.mxu0 0
        %1897 = vmatpush1.bf16.msra.mxu0 %v1878
        %1898 = vmatprep.subr.bf16.mxu0 0
        %1899 = vmatpush1.bf16.msra.mxu0 %v1877
        %1900 = vmatprep.subr.bf16.mxu0 0
        %1901 = vmatpush1.bf16.msra.mxu0 %v1876
        %1902 = vmatprep.subr.bf16.mxu0 0
        %1903 = vmatpush1.bf16.msra.mxu0 %v1875
        %1904 = vmatprep.subr.bf16.mxu0 0
        %1905 = vmatpush1.bf16.msra.mxu0 %v1874
        %1906 = vmatprep.subr.bf16.mxu0 0
        %1907 = vmatpush2.bf16.msra.mxu0 0
        %1908 = vmatprep.subr.bf16.mxu0 0
        %1909 = vmatpush2.bf16.msra.mxu0 0
        %1910 = vmatprep.subr.bf16.mxu0 0
        %1911 = vmatpush2.bf16.msra.mxu0 0
        %1912 = vmatprep.subr.bf16.mxu0 0
        %1913 = vmatpush2.bf16.msra.mxu0 0
        %1914 = vmatprep.subr.bf16.mxu0 0
        %1915 = vmatpush2.bf16.msra.mxu0 0
        %1916 = vmatprep.subr.bf16.mxu0 0
        %1917 = vmatpush2.bf16.msra.mxu0 0
        %1918 = vmatprep.subr.bf16.mxu0 0
        %1919 = vmatpush2.bf16.msra.mxu0 0
        %1920 = vmatprep.subr.bf16.mxu0 0
        %1921 = vmatpush2.bf16.msra.mxu0 0
        %1922 = vmatprep.mubr.bf16.mxu0 0
        %1923 = vmatmul.mubr.bf16.gmra.mxu0 %v1818
        %v1924 = vpop.f32.mrf.mxu0
        %v1925 = vadd.f32 %v1840, %v1924
        %v1926 = vpop.f32.mrf.mxu0
        %v1927 = vpop.f32.mrf.mxu0
        %v1928 = vadd.f32 %v1840, %v1927
        %v1929 = vpop.f32.mrf.mxu0
        %1930 = vdwg.mxu0
        %v1931 = vpack.c.bf16 %v1928, %v1925
        %v1932 = vld [vmem:[#allocation14] sm:$0xf]
        %v1933 = vld [vmem:[#allocation14 + $0x4] sm:$0xf]
        %v1934 = vld [vmem:[#allocation14 + $0x8] sm:$0xf]
        %v1935 = vld [vmem:[#allocation14 + $0xc] sm:$0xf]
        %v1936 = vld [vmem:[#allocation14 + $0x10] sm:$0xf]
        %v1937 = vld [vmem:[#allocation14 + $0x14] sm:$0xf]
        %v1938 = vld [vmem:[#allocation14 + $0x18] sm:$0xf]
        %v1939 = vld [vmem:[#allocation14 + $0x1c] sm:$0xf]
        %v1940 = vld [vmem:[#allocation14 + $0x20] sm:$0xf]
        %v1941 = vld [vmem:[#allocation14 + $0x24] sm:$0xf]
        %v1942 = vld [vmem:[#allocation14 + $0x28] sm:$0xf]
        %v1943 = vld [vmem:[#allocation14 + $0x2c] sm:$0xf]
        %v1944 = vld [vmem:[#allocation14 + $0x30] sm:$0xf]
        %v1945 = vld [vmem:[#allocation14 + $0x34] sm:$0xf]
        %v1946 = vld [vmem:[#allocation14 + $0x38] sm:$0xf]
        %v1947 = vld [vmem:[#allocation14 + $0x3c] sm:$0xf]
        %v1948 = vld [vmem:[%s7] sm:$0x1]
        %v1950 = vlaneseq
        %v1951 = vshrl.u32 %v1950, 7
        %v1952 = vsub.s32 0, %v1951
        %v1953 = vrot.slane %v1948, %v1952
        %v1971 = vunpack.c.l.b16 %v1932
        %v1972 = vunpack.c.l.b16 %v1933
        %v1973 = vunpack.c.l.b16 %v1934
        %v1974 = vunpack.c.l.b16 %v1935
        %v1975 = vunpack.c.l.b16 %v1936
        %v1976 = vunpack.c.l.b16 %v1937
        %v1977 = vunpack.c.l.b16 %v1938
        %v1978 = vunpack.c.l.b16 %v1939
        %v1979 = vunpack.c.l.b16 %v1940
        %v1980 = vunpack.c.l.b16 %v1941
        %v1981 = vunpack.c.l.b16 %v1942
        %v1982 = vunpack.c.l.b16 %v1943
        %v1983 = vunpack.c.l.b16 %v1944
        %v1984 = vunpack.c.l.b16 %v1945
        %v1985 = vunpack.c.l.b16 %v1946
        %v1986 = vunpack.c.l.b16 %v1947
        %v1987 = vpack.c.b16 %v1972, %v1971
        %v1988 = vpack.c.b16 %v1974, %v1973
        %v1989 = vpack.c.b16 %v1976, %v1975
        %v1990 = vpack.c.b16 %v1978, %v1977
        %v1991 = vpack.c.b16 %v1980, %v1979
        %v1992 = vpack.c.b16 %v1982, %v1981
        %v1993 = vpack.c.b16 %v1984, %v1983
        %v1994 = vpack.c.b16 %v1986, %v1985
        %2003 = vmatprep.subr.bf16.mxu0 0
        %2004 = vmatpush1.bf16.msra.mxu0 %v1994
        %2005 = vmatprep.subr.bf16.mxu0 0
        %2006 = vmatpush1.bf16.msra.mxu0 %v1993
        %2007 = vmatprep.subr.bf16.mxu0 0
        %2008 = vmatpush1.bf16.msra.mxu0 %v1992
        %2009 = vmatprep.subr.bf16.mxu0 0
        %2010 = vmatpush1.bf16.msra.mxu0 %v1991
        %2011 = vmatprep.subr.bf16.mxu0 0
        %2012 = vmatpush1.bf16.msra.mxu0 %v1990
        %2013 = vmatprep.subr.bf16.mxu0 0
        %2014 = vmatpush1.bf16.msra.mxu0 %v1989
        %2015 = vmatprep.subr.bf16.mxu0 0
        %2016 = vmatpush1.bf16.msra.mxu0 %v1988
        %2017 = vmatprep.subr.bf16.mxu0 0
        %2018 = vmatpush1.bf16.msra.mxu0 %v1987
        %2019 = vmatprep.subr.bf16.mxu0 0
        %2020 = vmatpush2.bf16.msra.mxu0 0
        %2021 = vmatprep.subr.bf16.mxu0 0
        %2022 = vmatpush2.bf16.msra.mxu0 0
        %2023 = vmatprep.subr.bf16.mxu0 0
        %2024 = vmatpush2.bf16.msra.mxu0 0
        %2025 = vmatprep.subr.bf16.mxu0 0
        %2026 = vmatpush2.bf16.msra.mxu0 0
        %2027 = vmatprep.subr.bf16.mxu0 0
        %2028 = vmatpush2.bf16.msra.mxu0 0
        %2029 = vmatprep.subr.bf16.mxu0 0
        %2030 = vmatpush2.bf16.msra.mxu0 0
        %2031 = vmatprep.subr.bf16.mxu0 0
        %2032 = vmatpush2.bf16.msra.mxu0 0
        %2033 = vmatprep.subr.bf16.mxu0 0
        %2034 = vmatpush2.bf16.msra.mxu0 0
        %2035 = vmatprep.mubr.bf16.mxu0 0
        %2036 = vmatmul.mubr.bf16.gmra.mxu0 %v1931
        %v2037 = vpop.f32.mrf.mxu0
        %v2038 = vadd.f32 %v1953, %v2037
        %v2039 = vpop.f32.mrf.mxu0
        %v2040 = vpop.f32.mrf.mxu0
        %v2041 = vadd.f32 %v1953, %v2040
        %v2042 = vpop.f32.mrf.mxu0
        %2043 = vdwg.mxu0
        %2044 = vst [vmem:[%s472] sm:$0xff] %v1925
        %2045 = vst [vmem:[%s472 + $0x8] sm:$0xff] %v1928
        %2046 = vst [vmem:[%s479] sm:$0xff] %v2038
        %2047 = vst [vmem:[%s479 + $0x8] sm:$0xff] %v2041
        %s2048 = sand.u32 %s237, 1
        %s2049 = scalar_lea.sflag [#allocation7], %s2048
        %s2050 = sand.u32 %s237, 1
        %s2051 = smul.addr %s2050, 16
        %s2052 = scalar_lea.vmem [#allocation16], %s2051
        %s2053 = sand.u32 %s265, 1
        %s2054 = scalar_lea.sflag [#allocation18], %s2053
        %s2055 = sand.u32 %s265, 1
        %s2056 = smul.addr %s2055, 16
        %s2057 = scalar_lea.vmem [#allocation17], %s2056
        // Predicated region
        $region81: #{tpu_custom_call.1} parent=51 // pred_check
          %p2058 = pneg %p247
        $region82: #{tpu_custom_call.1} parent=51 // pred_check_branch
          %2060 = sbr.rel (%p2058) target = $region84
        $region83: #{tpu_custom_call.1} parent=51 // pred_region
          %s2061 = smul.u32 2, %s40
          %s2063 = ssub.s32 256, 256
          %2064 = vsyncadd %s2049, %s2063
          %s2065 = smul.addr %s39, 2
          %s2066 = sadd.s32 %s2061, %s2065
          %s2067 = smul.addr %s2066, 128
          %s2068 = scalar_lea.hbm %s8, %s2067
          %s2069 = sshll.u32 %s2052, 4
          %s2070 = int_to_ptr.vmem [resolvable:$true] %s2069
          %2075 = dma.vmem_to_hbm [thread:$0]  %s2070, 256, %s2068, %s2049, 128, 128, 8
        $region84: #{tpu_custom_call.1} parent=51 // pred_fallthru
          _
        // Predicated region
        $region85: #{tpu_custom_call.1} parent=51 // pred_check
          %p2076 = pneg %p275
        $region86: #{tpu_custom_call.1} parent=51 // pred_check_branch
          %2078 = sbr.rel (%p2076) target = $region88
        $region87: #{tpu_custom_call.1} parent=51 // pred_region
          %s2079 = smul.u32 2, %s40
          %s2081 = ssub.s32 256, 256
          %2082 = vsyncadd %s2054, %s2081
          %s2083 = smul.addr %s39, 2
          %s2084 = sadd.s32 %s2079, %s2083
          %s2085 = smul.addr %s2084, 128
          %s2086 = scalar_lea.hbm %s9, %s2085
          %s2087 = sshll.u32 %s2057, 4
          %s2088 = int_to_ptr.vmem [resolvable:$true] %s2087
          %2093 = dma.vmem_to_hbm [thread:$0]  %s2088, 256, %s2086, %s2054, 128, 128, 8
        $region88: #{tpu_custom_call.1} parent=51 // pred_fallthru
          _
      $region52: #{tpu_custom_call.1} parent=5 // pred_fallthru
        _
      %p2094 = scmp.le.s32.totalorder 2, %s30
      // Predicated region
      $region89: #{tpu_custom_call.1} parent=5 // pred_check
        %p2095 = pneg %p2094
      $region90: #{tpu_custom_call.1} parent=5 // pred_check_branch
        %2097 = sbr.rel (%p2095) target = $region92
      $region91: #{tpu_custom_call.1} parent=5 // pred_region
        %s2098 = ssub.s32 %s30, 2
        // Predicated region
        $region93: #{tpu_custom_call.1} parent=91 // pred_check
          %p2099 = pneg %p253
        $region94: #{tpu_custom_call.1} parent=91 // pred_check_branch
          %2101 = sbr.rel (%p2099) target = $region96
        $region95: #{tpu_custom_call.1} parent=91 // pred_region
          %s2102 = sand.u32 %s238, 1
          %s2103 = scalar_lea.sflag [#allocation7], %s2102
          %s2104 = sand.u32 %s238, 1
          %s2105 = smul.addr %s2104, 16
          %s2106 = scalar_lea.vmem [#allocation16], %s2105
          %2107 = dma.done %s2103, 256
        $region96: #{tpu_custom_call.1} parent=91 // pred_fallthru
          _
        // Predicated region
        $region97: #{tpu_custom_call.1} parent=91 // pred_check
          %p2108 = pneg %p281
        $region98: #{tpu_custom_call.1} parent=91 // pred_check_branch
          %2110 = sbr.rel (%p2108) target = $region100
        $region99: #{tpu_custom_call.1} parent=91 // pred_region
          %s2111 = sand.u32 %s266, 1
          %s2112 = scalar_lea.sflag [#allocation18], %s2111
          %s2113 = sand.u32 %s266, 1
          %s2114 = smul.addr %s2113, 16
          %s2115 = scalar_lea.vmem [#allocation17], %s2114
          %2116 = dma.done %s2112, 256
        $region100: #{tpu_custom_call.1} parent=91 // pred_fallthru
          _
      $region92: #{tpu_custom_call.1} parent=5 // pred_fallthru
        _
    $region6: #{tpu_custom_call.1} parent=1 // loop_footer
      %s34 = sadd.s32 1, %s30
    $region7: #{tpu_custom_call.1} parent=1 // loop_footer_branch
      %29 = sbr.rel target = $region3
    $region8: #{tpu_custom_call.1} parent=1 // loop_exit
      _
    %2117 = vsyncpa [#allocation6], 1
    %s2118 = scalar_lea.sflag [#allocation6], 1
    %2119 = vsyncpa %s2118, 1
    %2120 = vsyncpa [#allocation9], 1
    %s2121 = scalar_lea.sflag [#allocation9], 1
    %2122 = vsyncpa %s2121, 1
    %2123 = vsyncpa [#allocation12], 1
    %2124 = vsyncpa [#allocation15], 1
    %2125 = vsyncpa [#allocation7], 1
    %s2126 = scalar_lea.sflag [#allocation7], 1
    %2127 = vsyncpa %s2126, 1
    %2128 = vsyncpa [#allocation18], 1
    %s2129 = scalar_lea.sflag [#allocation18], 1
    %2130 = vsyncpa %s2129, 1

</llo_original>
